<compile_context>
chip_gen: v6e
topology: v6e:2x2x1
jax: 0.10.0
libtpu: 0.0.40
codegen_flags: <defaults>
</compile_context>

<pallas_src>
import functools

import jax
import jax.numpy as jnp
from jax.experimental import pallas as pl
from jax.experimental.pallas import tpu as pltpu


# (source-plane parity, shift on the HxW grid) combos touched by the 3x3 conv
# on the upsampled 2Hx2W image, expressed on the sub-pixel planes.  Shared by
# the kernel (p2 patch layout) and the wrapper (weight packing).
_RC = ((1, -1), (0, 0), (1, 0), (0, 1))


# ---------------------------------------------------------------------------
# Pallas kernel: one batch element per grid step.
#   x_ref   : (C_in, S1)            input, spatial flattened (S1 = H*W lanes)
#   w1_ref  : (4*C_in, 9*C_in)      deconv weights, sub-pixel matmul form
#   b1_ref  : (4*C_in, 1)           deconv bias (tiled per plane)
#   w2_ref  : (4*C_out, 16*C_in)    3x3 conv weights (BN folded), per parity
#   b2_ref  : (4*C_out, 1)          conv bias (BN folded, tiled per plane)
#   col_ref : (1, S1) int32         q mod W -> column-validity masks
#   out_ref : (4*C_out, S1)         output sub-pixel planes (lane-dense)
# ---------------------------------------------------------------------------
def _up_conv_kernel(x_ref, w1_ref, b1_ref, w2_ref, b2_ref, col_ref, out_ref,
                    xpad_ref, ypad_ref, p1_ref, p2_ref, *,
                    img_w, pad, use_deconv):
    C_in, S1 = x_ref.shape
    f32 = jnp.float32

    # --- zero only the halos; interiors are fully overwritten below --------
    ypad_ref[:, :pad] = jnp.zeros((ypad_ref.shape[0], pad), f32)
    ypad_ref[:, pad + S1:] = jnp.zeros((ypad_ref.shape[0], pad), f32)

    # Column-validity masks: a flat lane shift by dj crosses HxW row
    # boundaries; those lanes must read zero (the convs' zero padding).
    col = col_ref[...]                                    # (1, S1) = q mod W
    masks = {dj: (col + dj >= 0) & (col + dj < img_w) for dj in (-1, 1)}

    def tap(src_ref, row_lo, row_hi, di, dj):
        start = pad + di * img_w + dj                     # static int
        blk = src_ref[row_lo:row_hi, start:start + S1]
        if dj != 0:
            blk = jnp.where(masks[dj], blk, 0.0)
        return blk

    if use_deconv:
        # --- stage 1: ConvTranspose2d(k=4, s=2, p=1), sub-pixel form -------
        xpad_ref[:, :pad] = jnp.zeros((C_in, pad), f32)
        xpad_ref[:, pad + S1:] = jnp.zeros((C_in, pad), f32)
        xpad_ref[:, pad:pad + S1] = x_ref[...]            # aligned interior store
        for di in (-1, 0, 1):                             # build im2col in place
            for dj in (-1, 0, 1):
                d = (di + 1) * 3 + (dj + 1)
                p1_ref[d * C_in:(d + 1) * C_in, :] = (
                    tap(xpad_ref, 0, C_in, di, dj).astype(p1_ref.dtype))
        y = jnp.dot(w1_ref[...], p1_ref[...],
                    preferred_element_type=f32) + b1_ref[...]
        ypad_ref[:, pad:pad + S1] = y                     # (4*C_in, S1), aligned
    else:
        # --- stage 1: nn.Upsample(scale_factor=2, mode='nearest') ----------
        x = x_ref[...]
        for plane in range(4):
            ypad_ref[plane * C_in:(plane + 1) * C_in, pad:pad + S1] = x

    # --- stage 2: Conv2d(3x3, p=1) + folded BN + ReLU, per output parity ---
    for rc, (pr, di) in enumerate(_RC):
        for cc, (ps, dj) in enumerate(_RC):
            plane = pr * 2 + ps
            t = rc * 4 + cc
            p2_ref[t * C_in:(t + 1) * C_in, :] = (
                tap(ypad_ref, plane * C_in, (plane + 1) * C_in, di, dj)
                .astype(p2_ref.dtype))
    acc = jnp.dot(w2_ref[...], p2_ref[...],
                  preferred_element_type=f32) + b2_ref[...]
    out_ref[...] = jnp.maximum(acc, 0.0).astype(out_ref.dtype)


# ---------------------------------------------------------------------------
# Weight packing (sub-pixel decomposition) + BN folding
# ---------------------------------------------------------------------------
def _pack_deconv_weights(wd, bd):
    """ConvTranspose2d(C, C, k=4, s=2, p=1) -> sub-pixel matmul weights.

    Output plane (r, s) (pixel (2u+r, 2v+s)) is a small conv on the original
    grid; the contributing row shift di selects deconv kernel row ky via
    r=0: {0:1, -1:3}, r=1: {+1:0, 0:2} (same mapping for columns).
    """
    C = wd.shape[0]
    k_of = ({0: 1, -1: 3}, {1: 0, 0: 2})
    w1 = jnp.zeros((4 * C, 9 * C), jnp.float32)
    for r in range(2):
        for s in range(2):
            rs = r * 2 + s
            for di, ky in k_of[r].items():
                for dj, kx in k_of[s].items():
                    d = (di + 1) * 3 + (dj + 1)
                    # block[co, ci] = wd[ci, co, ky, kx]  (PyTorch (in,out,kh,kw))
                    w1 = w1.at[rs * C:(rs + 1) * C,
                               d * C:(d + 1) * C].set(wd[:, :, ky, kx].T)
    b1 = jnp.tile(bd, 4).reshape(4 * C, 1)
    return w1, b1


def _pack_conv_weights(wc_f, b2_vec):
    """3x3 conv (BN folded) -> per-output-parity matmul over the 16
    (plane, shift) tap blocks (ordering must match the kernel's p2 / _RC)."""
    C_out, C_in = wc_f.shape[:2]
    w2 = jnp.zeros((4 * C_out, 16 * C_in), jnp.float32)
    for r in range(2):
        for s in range(2):
            rs = r * 2 + s
            for a in range(3):
                rc = _RC.index(((r + a - 1) % 2, (r + a - 1) // 2))
                for b in range(3):
                    cc = _RC.index(((s + b - 1) % 2, (s + b - 1) // 2))
                    t = rc * 4 + cc
                    w2 = w2.at[rs * C_out:(rs + 1) * C_out,
                               t * C_in:(t + 1) * C_in].set(wc_f[:, :, a, b])
    b2 = jnp.tile(b2_vec, 4).reshape(4 * C_out, 1)
    return w2, b2


# ---------------------------------------------------------------------------
# Wrapper: BN folding + weight packing + pallas_call + pixel shuffle
# ---------------------------------------------------------------------------
def up_conv_forward(x_nchw, params, *, use_deconv=True,
                    compute_dtype=jnp.bfloat16, eps=1e-5):
    """x_nchw: (N, C_in, H, W) -> (N, C_out, 2H, 2W).

    compute_dtype: MXU operand dtype (bf16 native on v6e/v7x; pass jnp.float32
    for a high-precision path).  Accumulation is always float32.
    """
    N, C_in, H, W = x_nchw.shape
    wc, bc = params["conv_w"], params["conv_b"]
    bn = params["bn"]
    C_out = wc.shape[0]

    # Fold inference-mode BatchNorm into the 3x3 conv.
    scale = bn["gamma"] * jax.lax.rsqrt(bn["var"] + eps)
    wc_f = wc * scale[:, None, None, None]
    b2_vec = (bc - bn["mean"]) * scale + bn["beta"]
    w2, b2 = _pack_conv_weights(wc_f, b2_vec)

    if use_deconv:
        w1, b1 = _pack_deconv_weights(params["deconv_w"], params["deconv_b"])
    else:
        w1 = jnp.zeros((4 * C_in, 9 * C_in), jnp.float32)
        b1 = jnp.zeros((4 * C_in, 1), jnp.float32)

    S1 = H * W
    # Halo covering the max tap shift (W+1), rounded to a lane multiple so the
    # interior stores of xpad/ypad are aligned, unmasked vst.
    pad = ((W + 1 + 127) // 128) * 128
    col_ids = (jnp.arange(S1, dtype=jnp.int32) % W).reshape(1, S1)
    x_rows = x_nchw.reshape(N, C_in, S1)                 # free reshape

    kernel = functools.partial(_up_conv_kernel, img_w=W, pad=pad,
                               use_deconv=use_deconv)

    op_bytes = jnp.dtype(compute_dtype).itemsize
    flops_s1 = 2 * (4 * C_in) * (9 * C_in) * S1 if use_deconv else 0
    flops = N * (flops_s1 + 2 * (4 * C_out) * (16 * C_in) * S1)
    bytes_accessed = (4 * N * C_in * S1 + 4 * N * 4 * C_out * S1
                      + op_bytes * (w1.size + w2.size)
                      + 4 * (b1.size + b2.size + S1))

    out_planes = pl.pallas_call(
        kernel,
        out_shape=jax.ShapeDtypeStruct((N, 4 * C_out, S1), jnp.float32),
        grid_spec=pltpu.PrefetchScalarGridSpec(
            num_scalar_prefetch=0,
            grid=(N,),   # one image per step: grid stays >= 2 for v7x megacore
            in_specs=[
                pl.BlockSpec((None, C_in, S1), lambda n: (n, 0, 0)),     # x
                pl.BlockSpec((4 * C_in, 9 * C_in), lambda n: (0, 0)),    # w1
                pl.BlockSpec((4 * C_in, 1), lambda n: (0, 0)),           # b1
                pl.BlockSpec((4 * C_out, 16 * C_in), lambda n: (0, 0)),  # w2 (BN folded)
                pl.BlockSpec((4 * C_out, 1), lambda n: (0, 0)),          # b2 (BN folded)
                pl.BlockSpec((1, S1), lambda n: (0, 0)),                 # col ids
            ],
            out_specs=pl.BlockSpec((None, 4 * C_out, S1), lambda n: (n, 0, 0)),
            scratch_shapes=[
                pltpu.VMEM((C_in, S1 + 2 * pad), jnp.float32),       # xpad
                pltpu.VMEM((4 * C_in, S1 + 2 * pad), jnp.float32),   # ypad (planes)
                pltpu.VMEM((9 * C_in, S1), compute_dtype),           # p1 im2col
                pltpu.VMEM((16 * C_in, S1), compute_dtype),          # p2 im2col
            ],
        ),
        compiler_params=pltpu.CompilerParams(
            dimension_semantics=("parallel",)),
        cost_estimate=pl.CostEstimate(
            flops=flops, transcendentals=0, bytes_accessed=bytes_accessed),
    )(x_rows, w1.astype(compute_dtype), b1, w2.astype(compute_dtype), b2,
      col_ids)

    # Layout-only pixel shuffle of the sub-pixel planes (the kernel's HBM store
    # stays lane-dense at S1 lanes; this transpose moves ~N*C_out*4*S1*4 bytes).
    o = out_planes.reshape(N, 2, 2, C_out, H, W).transpose(0, 3, 4, 1, 5, 2)
    return o.reshape(N, C_out, 2 * H, 2 * W)


# ---------------------------------------------------------------------------
# Pure-JAX reference (XLA convs) for verification
# ---------------------------------------------------------------------------
def up_conv_reference(x, params, *, use_deconv=True, eps=1e-5):
    wc, bc = params["conv_w"], params["conv_b"]
    bn = params["bn"]
    if use_deconv:
        wd, bd = params["deconv_w"], params["deconv_b"]
        # ConvTranspose2d(k=4,s=2,p=1) == dilate input by 2, pad by k-1-p=2,
        # cross-correlate with the spatially flipped, channel-swapped kernel.
        k_t = jnp.flip(wd, axis=(2, 3)).transpose(1, 0, 2, 3)
        y = jax.lax.conv_general_dilated(
            x, k_t, window_strides=(1, 1), padding=((2, 2), (2, 2)),
            lhs_dilation=(2, 2), rhs_dilation=(1, 1),
            dimension_numbers=("NCHW", "OIHW", "NCHW"),
            precision=jax.lax.Precision.HIGHEST)
        y = y + bd[None, :, None, None]
    else:
        y = jnp.repeat(jnp.repeat(x, 2, axis=2), 2, axis=3)   # nearest x2
    z = jax.lax.conv_general_dilated(
        y, wc, window_strides=(1, 1), padding=((1, 1), (1, 1)),
        dimension_numbers=("NCHW", "OIHW", "NCHW"),
        precision=jax.lax.Precision.HIGHEST)
    z = z + bc[None, :, None, None]
    inv = (bn["gamma"] * jax.lax.rsqrt(bn["var"] + eps))[None, :, None, None]
    z = (z - bn["mean"][None, :, None, None]) * inv + bn["beta"][None, :, None, None]
    return jnp.maximum(z, 0.0)


def make_params(key, c_in, c_out):
    ks = jax.random.split(key, 6)
    return {
        "deconv_w": 0.1 * jax.random.normal(ks[0], (c_in, c_in, 4, 4), jnp.float32),
        "deconv_b": 0.1 * jax.random.normal(ks[1], (c_in,), jnp.float32),
        "conv_w": 0.1 * jax.random.normal(ks[2], (c_out, c_in, 3, 3), jnp.float32),
        "conv_b": 0.1 * jax.random.normal(ks[3], (c_out,), jnp.float32),
        "bn": dict(
            gamma=1.0 + 0.05 * jax.random.normal(ks[4], (c_out,), jnp.float32),
            beta=0.02 * jnp.arange(c_out, dtype=jnp.float32),
            mean=0.01 * jax.random.normal(ks[5], (c_out,), jnp.float32),
            var=1.0 + 0.1 * jnp.ones((c_out,), jnp.float32),
        ),
    }


if __name__ == "__main__":
    # Small shapes consistent with the module: up_conv(ch_in=8, ch_out=4).
    N, C_in, C_out, H, W = 2, 8, 4, 16, 16

    key = jax.random.PRNGKey(0)
    kx, kp = jax.random.split(key)
    x = jax.random.normal(kx, (N, C_in, H, W), jnp.float32)
    params = make_params(kp, C_in, C_out)

    ref = up_conv_reference(x, params)

    # High-precision path (f32 MXU operands): tight check vs HIGHEST reference.
    out_f32 = jax.block_until_ready(
        up_conv_forward(x, params, compute_dtype=jnp.float32))
    assert out_f32.shape == (N, C_out, 2 * H, 2 * W)
    assert jnp.allclose(out_f32, ref, atol=1e-3, rtol=1e-3), (
        "f32 mismatch vs JAX reference, max abs err = "
        f"{float(jnp.max(jnp.abs(out_f32 - ref)))}")

    # Default path: bf16 MXU operands (v6e/v7x native), f32 accumulation.
    out_bf16 = jax.block_until_ready(up_conv_forward(x, params))
    assert jnp.allclose(out_bf16, ref, atol=1e-1, rtol=1e-1), (
        "bf16-operand mismatch vs JAX reference, max abs err = "
        f"{float(jnp.max(jnp.abs(out_bf16 - ref)))}")

    # convTranspose=False branch (nn.Upsample(scale_factor=2), nearest).
    ref_up = up_conv_reference(x, params, use_deconv=False)
    out_up = jax.block_until_ready(
        up_conv_forward(x, params, use_deconv=False, compute_dtype=jnp.float32))
    assert jnp.allclose(out_up, ref_up, atol=1e-3, rtol=1e-3), (
        "upsample-path mismatch vs JAX reference, max abs err = "
        f"{float(jnp.max(jnp.abs(out_up - ref_up)))}")

    print("KERNEL_OK")
</pallas_src>

<mosaic_0001>
module attributes {stable_mosaic.version = 11 : i64} {
  func.func @_up_conv_kernel(%arg0: i32, %arg1: memref<1x8x256xf32, #tpu.memory_space<vmem>>, %arg2: memref<32x72xf32, #tpu.memory_space<vmem>>, %arg3: memref<32x1xf32, #tpu.memory_space<vmem>>, %arg4: memref<16x128xf32, #tpu.memory_space<vmem>>, %arg5: memref<16x1xf32, #tpu.memory_space<vmem>>, %arg6: memref<1x256xi32, #tpu.memory_space<vmem>>, %arg7: memref<1x16x256xf32, #tpu.memory_space<vmem>>, %arg8: memref<8x512xf32, #tpu.memory_space<vmem>>, %arg9: memref<32x512xf32, #tpu.memory_space<vmem>>, %arg10: memref<72x256xf32, #tpu.memory_space<vmem>>, %arg11: memref<128x256xf32, #tpu.memory_space<vmem>>) attributes {dimension_semantics = [#tpu.dimension_semantics<parallel>], iteration_bounds = array<i64: 2>, scalar_prefetch = 0 : i64, scratch_operands = 4 : i64, tpu.core_type = #tpu.core_type<tc>, window_params = [{transform_indices = @transform_0, window_bounds = array<i64: 1, 8, 256>}, {pipeline_mode = #tpu.pipeline_mode<synchronous>, transform_indices = @transform_1, window_bounds = array<i64: 32, 72>}, {pipeline_mode = #tpu.pipeline_mode<synchronous>, transform_indices = @transform_2, window_bounds = array<i64: 32, 1>}, {pipeline_mode = #tpu.pipeline_mode<synchronous>, transform_indices = @transform_3, window_bounds = array<i64: 16, 128>}, {pipeline_mode = #tpu.pipeline_mode<synchronous>, transform_indices = @transform_4, window_bounds = array<i64: 16, 1>}, {pipeline_mode = #tpu.pipeline_mode<synchronous>, transform_indices = @transform_5, window_bounds = array<i64: 1, 256>}, {transform_indices = @transform_6, window_bounds = array<i64: 1, 16, 256>}]} {
    %cst = arith.constant 0.000000e+00 : f32
    %0 = vector.broadcast %cst : f32 to vector<32x128xf32>
    %c0 = arith.constant 0 : index
    %c0_0 = arith.constant 0 : index
    %1 = vector.load %arg9[%c0, %c0_0] : memref<32x512xf32, #tpu.memory_space<vmem>>, vector<32x128xf32>
    tpu.vector_store %arg9[%c0, %c0_0], %0 {strides = array<i32>} : memref<32x512xf32, #tpu.memory_space<vmem>>, vector<32x128xf32>,
    %cst_1 = arith.constant 0.000000e+00 : f32
    %2 = vector.broadcast %cst_1 : f32 to vector<32x128xf32>
    %c0_2 = arith.constant 0 : index
    %c384 = arith.constant 384 : index
    %3 = vector.load %arg9[%c0_2, %c384] : memref<32x512xf32, #tpu.memory_space<vmem>>, vector<32x128xf32>
    tpu.vector_store %arg9[%c0_2, %c384], %2 {strides = array<i32>} : memref<32x512xf32, #tpu.memory_space<vmem>>, vector<32x128xf32>,
    %c0_3 = arith.constant 0 : index
    %c0_4 = arith.constant 0 : index
    %4 = vector.load %arg6[%c0_3, %c0_4] : memref<1x256xi32, #tpu.memory_space<vmem>>, vector<1x256xi32>
    %c-1_i32 = arith.constant -1 : i32
    %5 = vector.broadcast %c-1_i32 : i32 to vector<1x256xi32>
    %6 = arith.addi %4, %5 : vector<1x256xi32>
    %c0_i32 = arith.constant 0 : i32
    %7 = vector.broadcast %c0_i32 : i32 to vector<1x256xi32>
    %8 = arith.cmpi sge, %6, %7 : vector<1x256xi32>
    %c-1_i32_5 = arith.constant -1 : i32
    %9 = vector.broadcast %c-1_i32_5 : i32 to vector<1x256xi32>
    %10 = arith.addi %4, %9 : vector<1x256xi32>
    %c16_i32 = arith.constant 16 : i32
    %11 = vector.broadcast %c16_i32 : i32 to vector<1x256xi32>
    %12 = arith.cmpi slt, %10, %11 : vector<1x256xi32>
    %13 = arith.andi %8, %12 : vector<1x256xi1>
    %c1_i32 = arith.constant 1 : i32
    %14 = vector.broadcast %c1_i32 : i32 to vector<1x256xi32>
    %15 = arith.addi %4, %14 : vector<1x256xi32>
    %c0_i32_6 = arith.constant 0 : i32
    %16 = vector.broadcast %c0_i32_6 : i32 to vector<1x256xi32>
    %17 = arith.cmpi sge, %15, %16 : vector<1x256xi32>
    %c1_i32_7 = arith.constant 1 : i32
    %18 = vector.broadcast %c1_i32_7 : i32 to vector<1x256xi32>
    %19 = arith.addi %4, %18 : vector<1x256xi32>
    %c16_i32_8 = arith.constant 16 : i32
    %20 = vector.broadcast %c16_i32_8 : i32 to vector<1x256xi32>
    %21 = arith.cmpi slt, %19, %20 : vector<1x256xi32>
    %22 = arith.andi %17, %21 : vector<1x256xi1>
    %cst_9 = arith.constant 0.000000e+00 : f32
    %23 = vector.broadcast %cst_9 : f32 to vector<8x128xf32>
    %c0_10 = arith.constant 0 : index
    %c0_11 = arith.constant 0 : index
    %24 = vector.load %arg8[%c0_10, %c0_11] : memref<8x512xf32, #tpu.memory_space<vmem>>, vector<8x128xf32>
    tpu.vector_store %arg8[%c0_10, %c0_11], %23 {strides = array<i32>} : memref<8x512xf32, #tpu.memory_space<vmem>>, vector<8x128xf32>,
    %cst_12 = arith.constant 0.000000e+00 : f32
    %25 = vector.broadcast %cst_12 : f32 to vector<8x128xf32>
    %c0_13 = arith.constant 0 : index
    %c384_14 = arith.constant 384 : index
    %26 = vector.load %arg8[%c0_13, %c384_14] : memref<8x512xf32, #tpu.memory_space<vmem>>, vector<8x128xf32>
    tpu.vector_store %arg8[%c0_13, %c384_14], %25 {strides = array<i32>} : memref<8x512xf32, #tpu.memory_space<vmem>>, vector<8x128xf32>,
    %c0_15 = arith.constant 0 : index
    %c0_16 = arith.constant 0 : index
    %c0_17 = arith.constant 0 : index
    %27 = vector.load %arg1[%c0_15, %c0_16, %c0_17] : memref<1x8x256xf32, #tpu.memory_space<vmem>>, vector<1x8x256xf32>
    %28 = vector.shape_cast %27 : vector<1x8x256xf32> to vector<8x256xf32>
    %c0_18 = arith.constant 0 : index
    %c128 = arith.constant 128 : index
    %29 = vector.load %arg8[%c0_18, %c128] : memref<8x512xf32, #tpu.memory_space<vmem>>, vector<8x256xf32>
    tpu.vector_store %arg8[%c0_18, %c128], %28 {strides = array<i32>} : memref<8x512xf32, #tpu.memory_space<vmem>>, vector<8x256xf32>,
    %c0_19 = arith.constant 0 : index
    %c111 = arith.constant 111 : index
    %30 = vector.load %arg8[%c0_19, %c111] : memref<8x512xf32, #tpu.memory_space<vmem>>, vector<8x256xf32>
    %cst_20 = arith.constant 0.000000e+00 : f32
    %31 = vector.shape_cast %13 : vector<1x256xi1> to vector<1x256xi1>
    %32 = vector.broadcast %31 : vector<1x256xi1> to vector<8x256xi1>
    %33 = vector.broadcast %cst_20 : f32 to vector<8x256xf32>
    %34 = arith.select %32, %30, %33 : vector<8x256xi1>, vector<8x256xf32>
    %c0_21 = arith.constant 0 : index
    %c0_22 = arith.constant 0 : index
    %35 = vector.load %arg10[%c0_21, %c0_22] : memref<72x256xf32, #tpu.memory_space<vmem>>, vector<8x256xf32>
    tpu.vector_store %arg10[%c0_21, %c0_22], %34 {strides = array<i32>} : memref<72x256xf32, #tpu.memory_space<vmem>>, vector<8x256xf32>,
    %c0_23 = arith.constant 0 : index
    %c112 = arith.constant 112 : index
    %36 = vector.load %arg8[%c0_23, %c112] : memref<8x512xf32, #tpu.memory_space<vmem>>, vector<8x256xf32>
    %c8 = arith.constant 8 : index
    %c0_24 = arith.constant 0 : index
    %37 = vector.load %arg10[%c8, %c0_24] : memref<72x256xf32, #tpu.memory_space<vmem>>, vector<8x256xf32>
    tpu.vector_store %arg10[%c8, %c0_24], %36 {strides = array<i32>} : memref<72x256xf32, #tpu.memory_space<vmem>>, vector<8x256xf32>,
    %c0_25 = arith.constant 0 : index
    %c113 = arith.constant 113 : index
    %38 = vector.load %arg8[%c0_25, %c113] : memref<8x512xf32, #tpu.memory_space<vmem>>, vector<8x256xf32>
    %cst_26 = arith.constant 0.000000e+00 : f32
    %39 = vector.shape_cast %22 : vector<1x256xi1> to vector<1x256xi1>
    %40 = vector.broadcast %39 : vector<1x256xi1> to vector<8x256xi1>
    %41 = vector.broadcast %cst_26 : f32 to vector<8x256xf32>
    %42 = arith.select %40, %38, %41 : vector<8x256xi1>, vector<8x256xf32>
    %c16 = arith.constant 16 : index
    %c0_27 = arith.constant 0 : index
    %43 = vector.load %arg10[%c16, %c0_27] : memref<72x256xf32, #tpu.memory_space<vmem>>, vector<8x256xf32>
    tpu.vector_store %arg10[%c16, %c0_27], %42 {strides = array<i32>} : memref<72x256xf32, #tpu.memory_space<vmem>>, vector<8x256xf32>,
    %c0_28 = arith.constant 0 : index
    %c127 = arith.constant 127 : index
    %44 = vector.load %arg8[%c0_28, %c127] : memref<8x512xf32, #tpu.memory_space<vmem>>, vector<8x256xf32>
    %cst_29 = arith.constant 0.000000e+00 : f32
    %45 = vector.shape_cast %13 : vector<1x256xi1> to vector<1x256xi1>
    %46 = vector.broadcast %45 : vector<1x256xi1> to vector<8x256xi1>
    %47 = vector.broadcast %cst_29 : f32 to vector<8x256xf32>
    %48 = arith.select %46, %44, %47 : vector<8x256xi1>, vector<8x256xf32>
    %c24 = arith.constant 24 : index
    %c0_30 = arith.constant 0 : index
    %49 = vector.load %arg10[%c24, %c0_30] : memref<72x256xf32, #tpu.memory_space<vmem>>, vector<8x256xf32>
    tpu.vector_store %arg10[%c24, %c0_30], %48 {strides = array<i32>} : memref<72x256xf32, #tpu.memory_space<vmem>>, vector<8x256xf32>,
    %c0_31 = arith.constant 0 : index
    %c128_32 = arith.constant 128 : index
    %50 = vector.load %arg8[%c0_31, %c128_32] : memref<8x512xf32, #tpu.memory_space<vmem>>, vector<8x256xf32>
    %c32 = arith.constant 32 : index
    %c0_33 = arith.constant 0 : index
    %51 = vector.load %arg10[%c32, %c0_33] : memref<72x256xf32, #tpu.memory_space<vmem>>, vector<8x256xf32>
    tpu.vector_store %arg10[%c32, %c0_33], %50 {strides = array<i32>} : memref<72x256xf32, #tpu.memory_space<vmem>>, vector<8x256xf32>,
    %c0_34 = arith.constant 0 : index
    %c129 = arith.constant 129 : index
    %52 = vector.load %arg8[%c0_34, %c129] : memref<8x512xf32, #tpu.memory_space<vmem>>, vector<8x256xf32>
    %cst_35 = arith.constant 0.000000e+00 : f32
    %53 = vector.shape_cast %22 : vector<1x256xi1> to vector<1x256xi1>
    %54 = vector.broadcast %53 : vector<1x256xi1> to vector<8x256xi1>
    %55 = vector.broadcast %cst_35 : f32 to vector<8x256xf32>
    %56 = arith.select %54, %52, %55 : vector<8x256xi1>, vector<8x256xf32>
    %c40 = arith.constant 40 : index
    %c0_36 = arith.constant 0 : index
    %57 = vector.load %arg10[%c40, %c0_36] : memref<72x256xf32, #tpu.memory_space<vmem>>, vector<8x256xf32>
    tpu.vector_store %arg10[%c40, %c0_36], %56 {strides = array<i32>} : memref<72x256xf32, #tpu.memory_space<vmem>>, vector<8x256xf32>,
    %c0_37 = arith.constant 0 : index
    %c143 = arith.constant 143 : index
    %58 = vector.load %arg8[%c0_37, %c143] : memref<8x512xf32, #tpu.memory_space<vmem>>, vector<8x256xf32>
    %cst_38 = arith.constant 0.000000e+00 : f32
    %59 = vector.shape_cast %13 : vector<1x256xi1> to vector<1x256xi1>
    %60 = vector.broadcast %59 : vector<1x256xi1> to vector<8x256xi1>
    %61 = vector.broadcast %cst_38 : f32 to vector<8x256xf32>
    %62 = arith.select %60, %58, %61 : vector<8x256xi1>, vector<8x256xf32>
    %c48 = arith.constant 48 : index
    %c0_39 = arith.constant 0 : index
    %63 = vector.load %arg10[%c48, %c0_39] : memref<72x256xf32, #tpu.memory_space<vmem>>, vector<8x256xf32>
    tpu.vector_store %arg10[%c48, %c0_39], %62 {strides = array<i32>} : memref<72x256xf32, #tpu.memory_space<vmem>>, vector<8x256xf32>,
    %c0_40 = arith.constant 0 : index
    %c144 = arith.constant 144 : index
    %64 = vector.load %arg8[%c0_40, %c144] : memref<8x512xf32, #tpu.memory_space<vmem>>, vector<8x256xf32>
    %c56 = arith.constant 56 : index
    %c0_41 = arith.constant 0 : index
    %65 = vector.load %arg10[%c56, %c0_41] : memref<72x256xf32, #tpu.memory_space<vmem>>, vector<8x256xf32>
    tpu.vector_store %arg10[%c56, %c0_41], %64 {strides = array<i32>} : memref<72x256xf32, #tpu.memory_space<vmem>>, vector<8x256xf32>,
    %c0_42 = arith.constant 0 : index
    %c145 = arith.constant 145 : index
    %66 = vector.load %arg8[%c0_42, %c145] : memref<8x512xf32, #tpu.memory_space<vmem>>, vector<8x256xf32>
    %cst_43 = arith.constant 0.000000e+00 : f32
    %67 = vector.shape_cast %22 : vector<1x256xi1> to vector<1x256xi1>
    %68 = vector.broadcast %67 : vector<1x256xi1> to vector<8x256xi1>
    %69 = vector.broadcast %cst_43 : f32 to vector<8x256xf32>
    %70 = arith.select %68, %66, %69 : vector<8x256xi1>, vector<8x256xf32>
    %c64 = arith.constant 64 : index
    %c0_44 = arith.constant 0 : index
    %71 = vector.load %arg10[%c64, %c0_44] : memref<72x256xf32, #tpu.memory_space<vmem>>, vector<8x256xf32>
    tpu.vector_store %arg10[%c64, %c0_44], %70 {strides = array<i32>} : memref<72x256xf32, #tpu.memory_space<vmem>>, vector<8x256xf32>,
    %c0_45 = arith.constant 0 : index
    %c0_46 = arith.constant 0 : index
    %72 = vector.load %arg2[%c0_45, %c0_46] : memref<32x72xf32, #tpu.memory_space<vmem>>, vector<32x72xf32>
    %c0_47 = arith.constant 0 : index
    %c0_48 = arith.constant 0 : index
    %73 = vector.load %arg10[%c0_47, %c0_48] : memref<72x256xf32, #tpu.memory_space<vmem>>, vector<72x256xf32>
    %cst_49 = arith.constant dense<0.000000e+00> : vector<32x256xf32>
    %74 = tpu.matmul %72, %73, %cst_49 {dimension_numbers = #tpu.dot_dimension_numbers<[1], [0], [0], [1], [0, 0, 1, 1], [], []>} : vector<32x72xf32>, vector<72x256xf32>, vector<32x256xf32> -> vector<32x256xf32>
    %c0_50 = arith.constant 0 : index
    %c0_51 = arith.constant 0 : index
    %75 = vector.load %arg3[%c0_50, %c0_51] : memref<32x1xf32, #tpu.memory_space<vmem>>, vector<32x1xf32>
    %76 = vector.broadcast %75 : vector<32x1xf32> to vector<32x256xf32>
    %77 = arith.addf %74, %76 : vector<32x256xf32>
    %c0_52 = arith.constant 0 : index
    %c128_53 = arith.constant 128 : index
    %78 = vector.load %arg9[%c0_52, %c128_53] : memref<32x512xf32, #tpu.memory_space<vmem>>, vector<32x256xf32>
    tpu.vector_store %arg9[%c0_52, %c128_53], %77 {strides = array<i32>} : memref<32x512xf32, #tpu.memory_space<vmem>>, vector<32x256xf32>,
    %c24_54 = arith.constant 24 : index
    %c111_55 = arith.constant 111 : index
    %79 = vector.load %arg9[%c24_54, %c111_55] : memref<32x512xf32, #tpu.memory_space<vmem>>, vector<8x256xf32>
    %cst_56 = arith.constant 0.000000e+00 : f32
    %80 = vector.shape_cast %13 : vector<1x256xi1> to vector<1x256xi1>
    %81 = vector.broadcast %80 : vector<1x256xi1> to vector<8x256xi1>
    %82 = vector.broadcast %cst_56 : f32 to vector<8x256xf32>
    %83 = arith.select %81, %79, %82 : vector<8x256xi1>, vector<8x256xf32>
    %c0_57 = arith.constant 0 : index
    %c0_58 = arith.constant 0 : index
    %84 = vector.load %arg11[%c0_57, %c0_58] : memref<128x256xf32, #tpu.memory_space<vmem>>, vector<8x256xf32>
    tpu.vector_store %arg11[%c0_57, %c0_58], %83 {strides = array<i32>} : memref<128x256xf32, #tpu.memory_space<vmem>>, vector<8x256xf32>,
    %c16_59 = arith.constant 16 : index
    %c112_60 = arith.constant 112 : index
    %85 = vector.load %arg9[%c16_59, %c112_60] : memref<32x512xf32, #tpu.memory_space<vmem>>, vector<8x256xf32>
    %c8_61 = arith.constant 8 : index
    %c0_62 = arith.constant 0 : index
    %86 = vector.load %arg11[%c8_61, %c0_62] : memref<128x256xf32, #tpu.memory_space<vmem>>, vector<8x256xf32>
    tpu.vector_store %arg11[%c8_61, %c0_62], %85 {strides = array<i32>} : memref<128x256xf32, #tpu.memory_space<vmem>>, vector<8x256xf32>,
    %c24_63 = arith.constant 24 : index
    %c112_64 = arith.constant 112 : index
    %87 = vector.load %arg9[%c24_63, %c112_64] : memref<32x512xf32, #tpu.memory_space<vmem>>, vector<8x256xf32>
    %c16_65 = arith.constant 16 : index
    %c0_66 = arith.constant 0 : index
    %88 = vector.load %arg11[%c16_65, %c0_66] : memref<128x256xf32, #tpu.memory_space<vmem>>, vector<8x256xf32>
    tpu.vector_store %arg11[%c16_65, %c0_66], %87 {strides = array<i32>} : memref<128x256xf32, #tpu.memory_space<vmem>>, vector<8x256xf32>,
    %c16_67 = arith.constant 16 : index
    %c113_68 = arith.constant 113 : index
    %89 = vector.load %arg9[%c16_67, %c113_68] : memref<32x512xf32, #tpu.memory_space<vmem>>, vector<8x256xf32>
    %cst_69 = arith.constant 0.000000e+00 : f32
    %90 = vector.shape_cast %22 : vector<1x256xi1> to vector<1x256xi1>
    %91 = vector.broadcast %90 : vector<1x256xi1> to vector<8x256xi1>
    %92 = vector.broadcast %cst_69 : f32 to vector<8x256xf32>
    %93 = arith.select %91, %89, %92 : vector<8x256xi1>, vector<8x256xf32>
    %c24_70 = arith.constant 24 : index
    %c0_71 = arith.constant 0 : index
    %94 = vector.load %arg11[%c24_70, %c0_71] : memref<128x256xf32, #tpu.memory_space<vmem>>, vector<8x256xf32>
    tpu.vector_store %arg11[%c24_70, %c0_71], %93 {strides = array<i32>} : memref<128x256xf32, #tpu.memory_space<vmem>>, vector<8x256xf32>,
    %c8_72 = arith.constant 8 : index
    %c127_73 = arith.constant 127 : index
    %95 = vector.load %arg9[%c8_72, %c127_73] : memref<32x512xf32, #tpu.memory_space<vmem>>, vector<8x256xf32>
    %cst_74 = arith.constant 0.000000e+00 : f32
    %96 = vector.shape_cast %13 : vector<1x256xi1> to vector<1x256xi1>
    %97 = vector.broadcast %96 : vector<1x256xi1> to vector<8x256xi1>
    %98 = vector.broadcast %cst_74 : f32 to vector<8x256xf32>
    %99 = arith.select %97, %95, %98 : vector<8x256xi1>, vector<8x256xf32>
    %c32_75 = arith.constant 32 : index
    %c0_76 = arith.constant 0 : index
    %100 = vector.load %arg11[%c32_75, %c0_76] : memref<128x256xf32, #tpu.memory_space<vmem>>, vector<8x256xf32>
    tpu.vector_store %arg11[%c32_75, %c0_76], %99 {strides = array<i32>} : memref<128x256xf32, #tpu.memory_space<vmem>>, vector<8x256xf32>,
    %c0_77 = arith.constant 0 : index
    %c128_78 = arith.constant 128 : index
    %101 = vector.load %arg9[%c0_77, %c128_78] : memref<32x512xf32, #tpu.memory_space<vmem>>, vector<8x256xf32>
    %c40_79 = arith.constant 40 : index
    %c0_80 = arith.constant 0 : index
    %102 = vector.load %arg11[%c40_79, %c0_80] : memref<128x256xf32, #tpu.memory_space<vmem>>, vector<8x256xf32>
    tpu.vector_store %arg11[%c40_79, %c0_80], %101 {strides = array<i32>} : memref<128x256xf32, #tpu.memory_space<vmem>>, vector<8x256xf32>,
    %c8_81 = arith.constant 8 : index
    %c128_82 = arith.constant 128 : index
    %103 = vector.load %arg9[%c8_81, %c128_82] : memref<32x512xf32, #tpu.memory_space<vmem>>, vector<8x256xf32>
    %c48_83 = arith.constant 48 : index
    %c0_84 = arith.constant 0 : index
    %104 = vector.load %arg11[%c48_83, %c0_84] : memref<128x256xf32, #tpu.memory_space<vmem>>, vector<8x256xf32>
    tpu.vector_store %arg11[%c48_83, %c0_84], %103 {strides = array<i32>} : memref<128x256xf32, #tpu.memory_space<vmem>>, vector<8x256xf32>,
    %c0_85 = arith.constant 0 : index
    %c129_86 = arith.constant 129 : index
    %105 = vector.load %arg9[%c0_85, %c129_86] : memref<32x512xf32, #tpu.memory_space<vmem>>, vector<8x256xf32>
    %cst_87 = arith.constant 0.000000e+00 : f32
    %106 = vector.shape_cast %22 : vector<1x256xi1> to vector<1x256xi1>
    %107 = vector.broadcast %106 : vector<1x256xi1> to vector<8x256xi1>
    %108 = vector.broadcast %cst_87 : f32 to vector<8x256xf32>
    %109 = arith.select %107, %105, %108 : vector<8x256xi1>, vector<8x256xf32>
    %c56_88 = arith.constant 56 : index
    %c0_89 = arith.constant 0 : index
    %110 = vector.load %arg11[%c56_88, %c0_89] : memref<128x256xf32, #tpu.memory_space<vmem>>, vector<8x256xf32>
    tpu.vector_store %arg11[%c56_88, %c0_89], %109 {strides = array<i32>} : memref<128x256xf32, #tpu.memory_space<vmem>>, vector<8x256xf32>,
    %c24_90 = arith.constant 24 : index
    %c127_91 = arith.constant 127 : index
    %111 = vector.load %arg9[%c24_90, %c127_91] : memref<32x512xf32, #tpu.memory_space<vmem>>, vector<8x256xf32>
    %cst_92 = arith.constant 0.000000e+00 : f32
    %112 = vector.shape_cast %13 : vector<1x256xi1> to vector<1x256xi1>
    %113 = vector.broadcast %112 : vector<1x256xi1> to vector<8x256xi1>
    %114 = vector.broadcast %cst_92 : f32 to vector<8x256xf32>
    %115 = arith.select %113, %111, %114 : vector<8x256xi1>, vector<8x256xf32>
    %c64_93 = arith.constant 64 : index
    %c0_94 = arith.constant 0 : index
    %116 = vector.load %arg11[%c64_93, %c0_94] : memref<128x256xf32, #tpu.memory_space<vmem>>, vector<8x256xf32>
    tpu.vector_store %arg11[%c64_93, %c0_94], %115 {strides = array<i32>} : memref<128x256xf32, #tpu.memory_space<vmem>>, vector<8x256xf32>,
    %c16_95 = arith.constant 16 : index
    %c128_96 = arith.constant 128 : index
    %117 = vector.load %arg9[%c16_95, %c128_96] : memref<32x512xf32, #tpu.memory_space<vmem>>, vector<8x256xf32>
    %c72 = arith.constant 72 : index
    %c0_97 = arith.constant 0 : index
    %118 = vector.load %arg11[%c72, %c0_97] : memref<128x256xf32, #tpu.memory_space<vmem>>, vector<8x256xf32>
    tpu.vector_store %arg11[%c72, %c0_97], %117 {strides = array<i32>} : memref<128x256xf32, #tpu.memory_space<vmem>>, vector<8x256xf32>,
    %c24_98 = arith.constant 24 : index
    %c128_99 = arith.constant 128 : index
    %119 = vector.load %arg9[%c24_98, %c128_99] : memref<32x512xf32, #tpu.memory_space<vmem>>, vector<8x256xf32>
    %c80 = arith.constant 80 : index
    %c0_100 = arith.constant 0 : index
    %120 = vector.load %arg11[%c80, %c0_100] : memref<128x256xf32, #tpu.memory_space<vmem>>, vector<8x256xf32>
    tpu.vector_store %arg11[%c80, %c0_100], %119 {strides = array<i32>} : memref<128x256xf32, #tpu.memory_space<vmem>>, vector<8x256xf32>,
    %c16_101 = arith.constant 16 : index
    %c129_102 = arith.constant 129 : index
    %121 = vector.load %arg9[%c16_101, %c129_102] : memref<32x512xf32, #tpu.memory_space<vmem>>, vector<8x256xf32>
    %cst_103 = arith.constant 0.000000e+00 : f32
    %122 = vector.shape_cast %22 : vector<1x256xi1> to vector<1x256xi1>
    %123 = vector.broadcast %122 : vector<1x256xi1> to vector<8x256xi1>
    %124 = vector.broadcast %cst_103 : f32 to vector<8x256xf32>
    %125 = arith.select %123, %121, %124 : vector<8x256xi1>, vector<8x256xf32>
    %c88 = arith.constant 88 : index
    %c0_104 = arith.constant 0 : index
    %126 = vector.load %arg11[%c88, %c0_104] : memref<128x256xf32, #tpu.memory_space<vmem>>, vector<8x256xf32>
    tpu.vector_store %arg11[%c88, %c0_104], %125 {strides = array<i32>} : memref<128x256xf32, #tpu.memory_space<vmem>>, vector<8x256xf32>,
    %c8_105 = arith.constant 8 : index
    %c143_106 = arith.constant 143 : index
    %127 = vector.load %arg9[%c8_105, %c143_106] : memref<32x512xf32, #tpu.memory_space<vmem>>, vector<8x256xf32>
    %cst_107 = arith.constant 0.000000e+00 : f32
    %128 = vector.shape_cast %13 : vector<1x256xi1> to vector<1x256xi1>
    %129 = vector.broadcast %128 : vector<1x256xi1> to vector<8x256xi1>
    %130 = vector.broadcast %cst_107 : f32 to vector<8x256xf32>
    %131 = arith.select %129, %127, %130 : vector<8x256xi1>, vector<8x256xf32>
    %c96 = arith.constant 96 : index
    %c0_108 = arith.constant 0 : index
    %132 = vector.load %arg11[%c96, %c0_108] : memref<128x256xf32, #tpu.memory_space<vmem>>, vector<8x256xf32>
    tpu.vector_store %arg11[%c96, %c0_108], %131 {strides = array<i32>} : memref<128x256xf32, #tpu.memory_space<vmem>>, vector<8x256xf32>,
    %c0_109 = arith.constant 0 : index
    %c144_110 = arith.constant 144 : index
    %133 = vector.load %arg9[%c0_109, %c144_110] : memref<32x512xf32, #tpu.memory_space<vmem>>, vector<8x256xf32>
    %c104 = arith.constant 104 : index
    %c0_111 = arith.constant 0 : index
    %134 = vector.load %arg11[%c104, %c0_111] : memref<128x256xf32, #tpu.memory_space<vmem>>, vector<8x256xf32>
    tpu.vector_store %arg11[%c104, %c0_111], %133 {strides = array<i32>} : memref<128x256xf32, #tpu.memory_space<vmem>>, vector<8x256xf32>,
    %c8_112 = arith.constant 8 : index
    %c144_113 = arith.constant 144 : index
    %135 = vector.load %arg9[%c8_112, %c144_113] : memref<32x512xf32, #tpu.memory_space<vmem>>, vector<8x256xf32>
    %c112_114 = arith.constant 112 : index
    %c0_115 = arith.constant 0 : index
    %136 = vector.load %arg11[%c112_114, %c0_115] : memref<128x256xf32, #tpu.memory_space<vmem>>, vector<8x256xf32>
    tpu.vector_store %arg11[%c112_114, %c0_115], %135 {strides = array<i32>} : memref<128x256xf32, #tpu.memory_space<vmem>>, vector<8x256xf32>,
    %c0_116 = arith.constant 0 : index
    %c145_117 = arith.constant 145 : index
    %137 = vector.load %arg9[%c0_116, %c145_117] : memref<32x512xf32, #tpu.memory_space<vmem>>, vector<8x256xf32>
    %cst_118 = arith.constant 0.000000e+00 : f32
    %138 = vector.shape_cast %22 : vector<1x256xi1> to vector<1x256xi1>
    %139 = vector.broadcast %138 : vector<1x256xi1> to vector<8x256xi1>
    %140 = vector.broadcast %cst_118 : f32 to vector<8x256xf32>
    %141 = arith.select %139, %137, %140 : vector<8x256xi1>, vector<8x256xf32>
    %c120 = arith.constant 120 : index
    %c0_119 = arith.constant 0 : index
    %142 = vector.load %arg11[%c120, %c0_119] : memref<128x256xf32, #tpu.memory_space<vmem>>, vector<8x256xf32>
    tpu.vector_store %arg11[%c120, %c0_119], %141 {strides = array<i32>} : memref<128x256xf32, #tpu.memory_space<vmem>>, vector<8x256xf32>,
    %c0_120 = arith.constant 0 : index
    %c0_121 = arith.constant 0 : index
    %143 = vector.load %arg4[%c0_120, %c0_121] : memref<16x128xf32, #tpu.memory_space<vmem>>, vector<16x128xf32>
    %c0_122 = arith.constant 0 : index
    %c0_123 = arith.constant 0 : index
    %144 = vector.load %arg11[%c0_122, %c0_123] : memref<128x256xf32, #tpu.memory_space<vmem>>, vector<128x256xf32>
    %cst_124 = arith.constant dense<0.000000e+00> : vector<16x256xf32>
    %145 = tpu.matmul %143, %144, %cst_124 {dimension_numbers = #tpu.dot_dimension_numbers<[1], [0], [0], [1], [0, 0, 1, 1], [], []>} : vector<16x128xf32>, vector<128x256xf32>, vector<16x256xf32> -> vector<16x256xf32>
    %c0_125 = arith.constant 0 : index
    %c0_126 = arith.constant 0 : index
    %146 = vector.load %arg5[%c0_125, %c0_126] : memref<16x1xf32, #tpu.memory_space<vmem>>, vector<16x1xf32>
    %147 = vector.broadcast %146 : vector<16x1xf32> to vector<16x256xf32>
    %148 = arith.addf %145, %147 : vector<16x256xf32>
    %cst_127 = arith.constant 0.000000e+00 : f32
    %149 = vector.broadcast %cst_127 : f32 to vector<16x256xf32>
    %150 = arith.maximumf %148, %149 : vector<16x256xf32>
    %c0_128 = arith.constant 0 : index
    %c0_129 = arith.constant 0 : index
    %c0_130 = arith.constant 0 : index
    %151 = vector.load %arg7[%c0_128, %c0_129, %c0_130] : memref<1x16x256xf32, #tpu.memory_space<vmem>>, vector<1x16x256xf32>
    %152 = vector.shape_cast %151 : vector<1x16x256xf32> to vector<16x256xf32>
    %153 = vector.shape_cast %150 : vector<16x256xf32> to vector<1x16x256xf32>
    tpu.vector_store %arg7[%c0_128, %c0_129, %c0_130], %153 {strides = array<i32>} : memref<1x16x256xf32, #tpu.memory_space<vmem>>, vector<1x16x256xf32>,
    return
  }
  func.func @transform_0(%arg0: i32) -> (i32, i32, i32) {
    %c0_i32 = arith.constant 0 : i32
    %c0_i32_0 = arith.constant 0 : i32
    %c0_i32_1 = arith.constant 0 : i32
    return %arg0, %c0_i32, %c0_i32_0 : i32, i32, i32
  }
  func.func @transform_1(%arg0: i32) -> (i32, i32) {
    %c0_i32 = arith.constant 0 : i32
    %c0_i32_0 = arith.constant 0 : i32
    %c0_i32_1 = arith.constant 0 : i32
    return %c0_i32, %c0_i32_0 : i32, i32
  }
  func.func @transform_2(%arg0: i32) -> (i32, i32) {
    %c0_i32 = arith.constant 0 : i32
    %c0_i32_0 = arith.constant 0 : i32
    %c0_i32_1 = arith.constant 0 : i32
    return %c0_i32, %c0_i32_0 : i32, i32
  }
  func.func @transform_3(%arg0: i32) -> (i32, i32) {
    %c0_i32 = arith.constant 0 : i32
    %c0_i32_0 = arith.constant 0 : i32
    %c0_i32_1 = arith.constant 0 : i32
    return %c0_i32, %c0_i32_0 : i32, i32
  }
  func.func @transform_4(%arg0: i32) -> (i32, i32) {
    %c0_i32 = arith.constant 0 : i32
    %c0_i32_0 = arith.constant 0 : i32
    %c0_i32_1 = arith.constant 0 : i32
    return %c0_i32, %c0_i32_0 : i32, i32
  }
  func.func @transform_5(%arg0: i32) -> (i32, i32) {
    %c0_i32 = arith.constant 0 : i32
    %c0_i32_0 = arith.constant 0 : i32
    %c0_i32_1 = arith.constant 0 : i32
    return %c0_i32, %c0_i32_0 : i32, i32
  }
  func.func @transform_6(%arg0: i32) -> (i32, i32, i32) {
    %c0_i32 = arith.constant 0 : i32
    %c0_i32_0 = arith.constant 0 : i32
    %c0_i32_1 = arith.constant 0 : i32
    return %arg0, %c0_i32, %c0_i32_0 : i32, i32, i32
  }
}

</mosaic_0001>

<llo_original>
// kernel: tpu_custom_call.1
$region0: #{tpu_custom_call.1}
  #allocation0 [shape = 'u32[]', space=smem, size = 0x4, offset = 0x4, fixed_abs, tag = 'smem constant byte address 0x4 - core index']
  #allocation1 [shape = 'u32[144,128]{1,0:T(1,128)}', space=vmem, size = 0x12000, scoped, tag = 'internal scratch']
  #allocation2 [shape = 'f32[8,512]{1,0:T(8,128)}', space=vmem, size = 0x4000, scoped, tag = 'scratch operand']
  #allocation3 [shape = 'f32[32,512]{1,0:T(8,128)}', space=vmem, size = 0x10000, scoped, tag = 'scratch operand']
  #allocation4 [shape = 'f32[72,256]{1,0:T(8,128)}', space=vmem, size = 0x12000, scoped, tag = 'scratch operand']
  #allocation5 [shape = 'f32[128,256]{1,0:T(8,128)}', space=vmem, size = 0x20000, scoped, tag = 'scratch operand']
  %s0 = inlined_call_operand.vmem [shape: f32[2,8,256], index: 0, kind: input, shape index: {}]
  %s1 = inlined_call_operand.hbm [shape: f32[32,72], index: 1, kind: input, shape index: {}]
  %s2 = inlined_call_operand.vmem [shape: f32[32,1], index: 2, kind: input, shape index: {}]
  %s3 = inlined_call_operand.vmem [shape: f32[16,128], index: 3, kind: input, shape index: {}]
  %s4 = inlined_call_operand.vmem [shape: f32[16,1], index: 4, kind: input, shape index: {}]
  %s5 = inlined_call_operand.vmem [shape: s32[1,256], index: 5, kind: input, shape index: {}]
  %s6 = inlined_call_operand.hbm [shape: f32[2,16,256], index: 6, kind: output, shape index: {}]
  %s7 = sld [smem:[#allocation0]]
  $region61: #{tpu_custom_call.1} parent=0
    _
  %s9 = ssub.s32 1, %s7
  %s10 = scalar_select 0, %s9, %s7
  $region1: #{tpu_custom_call.1} parent=0
    #allocation6 [shape = 'u8[16384]{0}', space=vmem, size = 0x4000, scoped, tag = 'input window, operand 1, single buffered']
    #allocation7 [shape = 's32[2]{0}', space=sflag, size = 0x8, scoped, tag = 'scoped memory for tpu_custom_call.1']
    #allocation8 [shape = 's32[2]{0}', space=sflag, size = 0x8, scoped, tag = 'scoped memory for tpu_custom_call.1']
    #allocation9 [shape = 'u8[32768]{0}', space=vmem, size = 0x8000, scoped, tag = 'output window, operand 0']
    %11 = vsyncpa [#allocation7], 0
    %12 = vsyncpa [#allocation8], 0
    %s13 = scalar_lea.sflag [#allocation8], 1
    %14 = vsyncpa %s13, 0
    loop: start=0, step=1, limit=4
    $region2: #{tpu_custom_call.1} parent=1 // loop_pre_header
      _
    $region3: #{tpu_custom_call.1} parent=1 // loop_header
      %s16 = sphi 0, %s20
      %p17 = scmp.ge.s32.totalorder %s16, 4
      %s26 = sphi 0, %s28
      %s29 = sphi 0, %s26
      %s30 = sphi 0, %s29
      %s46 = sphi 0, %s30
      %s50 = sphi 0, %s50
      %s52 = sphi 0, %s50
      %s53 = sphi 0, %s52
      %s67 = sphi 0, %s53
      %s71 = sphi 0, %s71
      %s73 = sphi 0, %s71
      %s74 = sphi 0, %s73
      %s88 = sphi 0, %s74
      %s92 = sphi 0, %s92
      %s94 = sphi 0, %s92
      %s95 = sphi 0, %s94
      %s109 = sphi 0, %s95
      %s113 = sphi 0, %s113
      %s115 = sphi 0, %s113
      %s116 = sphi 0, %s115
      %s130 = sphi 0, %s116
      %s134 = sphi 0, %s134
      %s136 = sphi 0, %s134
      %s137 = sphi 0, %s136
      %s151 = sphi 0, %s137
      %s157 = sphi 0, %s159
      %s160 = sphi 0, %s157
      %s161 = sphi 0, %s160
      %s177 = sphi 0, %s161
    $region4: #{tpu_custom_call.1} parent=1 // loop_header_branch
      %19 = sbr.rel (%p17) target = $region8
    $region5: #{tpu_custom_call.1} parent=1 // loop_body
      %s21 = ssub.s32 %s16, 1
      %s22 = ssub.s32 %s16, 2
      %s23 = sadd.s32 %s16, 1
      %s24 = ssub.s32 %s16, %s23
      %p25 = scmp.eq.s32.totalorder %s24, 0
      %s27 = sadd.s32 %s26, 1
      %s28 = scalar_select %p25, %s26, %s27
      %p31 = pneg %p25
      %p32 = scmp.eq.s32.totalorder %s16, 1
      %p33 = por %p31, %p32
      %p34 = scmp.ne.s32.totalorder %s26, %s29
      %p35 = scmp.eq.s32.totalorder %s16, 0
      %p36 = por %p34, %p35
      %p37 = scmp.ne.s32.totalorder %s26, %s29
      %p38 = scmp.eq.s32.totalorder %s21, 1
      %p39 = por %p37, %p38
      %p40 = scmp.ne.s32.totalorder %s29, %s30
      %p41 = scmp.eq.s32.totalorder %s21, 0
      %p42 = por %p40, %p41
      %p43 = scmp.ne.s32.totalorder %s29, %s30
      %p44 = scmp.eq.s32.totalorder %s22, 1
      %p45 = por %p43, %p44
      %p47 = scmp.ne.s32.totalorder %s30, %s46
      %p48 = scmp.eq.s32.totalorder %s22, 0
      %p49 = por %p47, %p48
      %s51 = sadd.s32 %s50, 1
      %p54 = scmp.eq.s32.totalorder %s16, 1
      %p55 = scmp.ne.s32.totalorder %s50, %s52
      %p56 = scmp.eq.s32.totalorder %s16, 0
      %p57 = por %p55, %p56
      %p58 = scmp.ne.s32.totalorder %s50, %s52
      %p59 = scmp.eq.s32.totalorder %s21, 1
      %p60 = por %p58, %p59
      %p61 = scmp.ne.s32.totalorder %s52, %s53
      %p62 = scmp.eq.s32.totalorder %s21, 0
      %p63 = por %p61, %p62
      %p64 = scmp.ne.s32.totalorder %s52, %s53
      %p65 = scmp.eq.s32.totalorder %s22, 1
      %p66 = por %p64, %p65
      %p68 = scmp.ne.s32.totalorder %s53, %s67
      %p69 = scmp.eq.s32.totalorder %s22, 0
      %p70 = por %p68, %p69
      %s72 = sadd.s32 %s71, 1
      %p75 = scmp.eq.s32.totalorder %s16, 1
      %p76 = scmp.ne.s32.totalorder %s71, %s73
      %p77 = scmp.eq.s32.totalorder %s16, 0
      %p78 = por %p76, %p77
      %p79 = scmp.ne.s32.totalorder %s71, %s73
      %p80 = scmp.eq.s32.totalorder %s21, 1
      %p81 = por %p79, %p80
      %p82 = scmp.ne.s32.totalorder %s73, %s74
      %p83 = scmp.eq.s32.totalorder %s21, 0
      %p84 = por %p82, %p83
      %p85 = scmp.ne.s32.totalorder %s73, %s74
      %p86 = scmp.eq.s32.totalorder %s22, 1
      %p87 = por %p85, %p86
      %p89 = scmp.ne.s32.totalorder %s74, %s88
      %p90 = scmp.eq.s32.totalorder %s22, 0
      %p91 = por %p89, %p90
      %s93 = sadd.s32 %s92, 1
      %p96 = scmp.eq.s32.totalorder %s16, 1
      %p97 = scmp.ne.s32.totalorder %s92, %s94
      %p98 = scmp.eq.s32.totalorder %s16, 0
      %p99 = por %p97, %p98
      %p100 = scmp.ne.s32.totalorder %s92, %s94
      %p101 = scmp.eq.s32.totalorder %s21, 1
      %p102 = por %p100, %p101
      %p103 = scmp.ne.s32.totalorder %s94, %s95
      %p104 = scmp.eq.s32.totalorder %s21, 0
      %p105 = por %p103, %p104
      %p106 = scmp.ne.s32.totalorder %s94, %s95
      %p107 = scmp.eq.s32.totalorder %s22, 1
      %p108 = por %p106, %p107
      %p110 = scmp.ne.s32.totalorder %s95, %s109
      %p111 = scmp.eq.s32.totalorder %s22, 0
      %p112 = por %p110, %p111
      %s114 = sadd.s32 %s113, 1
      %p117 = scmp.eq.s32.totalorder %s16, 1
      %p118 = scmp.ne.s32.totalorder %s113, %s115
      %p119 = scmp.eq.s32.totalorder %s16, 0
      %p120 = por %p118, %p119
      %p121 = scmp.ne.s32.totalorder %s113, %s115
      %p122 = scmp.eq.s32.totalorder %s21, 1
      %p123 = por %p121, %p122
      %p124 = scmp.ne.s32.totalorder %s115, %s116
      %p125 = scmp.eq.s32.totalorder %s21, 0
      %p126 = por %p124, %p125
      %p127 = scmp.ne.s32.totalorder %s115, %s116
      %p128 = scmp.eq.s32.totalorder %s22, 1
      %p129 = por %p127, %p128
      %p131 = scmp.ne.s32.totalorder %s116, %s130
      %p132 = scmp.eq.s32.totalorder %s22, 0
      %p133 = por %p131, %p132
      %s135 = sadd.s32 %s134, 1
      %p138 = scmp.eq.s32.totalorder %s16, 1
      %p139 = scmp.ne.s32.totalorder %s134, %s136
      %p140 = scmp.eq.s32.totalorder %s16, 0
      %p141 = por %p139, %p140
      %p142 = scmp.ne.s32.totalorder %s134, %s136
      %p143 = scmp.eq.s32.totalorder %s21, 1
      %p144 = por %p142, %p143
      %p145 = scmp.ne.s32.totalorder %s136, %s137
      %p146 = scmp.eq.s32.totalorder %s21, 0
      %p147 = por %p145, %p146
      %p148 = scmp.ne.s32.totalorder %s136, %s137
      %p149 = scmp.eq.s32.totalorder %s22, 1
      %p150 = por %p148, %p149
      %p152 = scmp.ne.s32.totalorder %s137, %s151
      %p153 = scmp.eq.s32.totalorder %s22, 0
      %p154 = por %p152, %p153
      %s155 = ssub.s32 %s16, %s23
      %p156 = scmp.eq.s32.totalorder %s155, 0
      %s158 = sadd.s32 %s157, 1
      %s159 = scalar_select %p156, %s157, %s158
      %p162 = pneg %p156
      %p163 = scmp.eq.s32.totalorder %s16, 1
      %p164 = por %p162, %p163
      %p165 = scmp.ne.s32.totalorder %s157, %s160
      %p166 = scmp.eq.s32.totalorder %s16, 0
      %p167 = por %p165, %p166
      %p168 = scmp.ne.s32.totalorder %s157, %s160
      %p169 = scmp.eq.s32.totalorder %s21, 1
      %p170 = por %p168, %p169
      %p171 = scmp.ne.s32.totalorder %s160, %s161
      %p172 = scmp.eq.s32.totalorder %s21, 0
      %p173 = por %p171, %p172
      %p174 = scmp.ne.s32.totalorder %s160, %s161
      %p175 = scmp.eq.s32.totalorder %s22, 1
      %p176 = por %p174, %p175
      %p178 = scmp.ne.s32.totalorder %s161, %s177
      %p179 = scmp.eq.s32.totalorder %s22, 0
      %p180 = por %p178, %p179
      %p181 = scmp.le.s32.totalorder 1, %s16
      %p182 = scmp.lt.s32.totalorder %s16, 3
      %p183 = pnand %p181, %p182
      %p184 = pneg %p183
      // Predicated region
      $region9: #{tpu_custom_call.1} parent=5 // pred_check
        _
      $region10: #{tpu_custom_call.1} parent=5 // pred_check_branch
        %186 = sbr.rel (%p183) target = $region12
      $region11: #{tpu_custom_call.1} parent=5 // pred_region
        %s187 = ssub.s32 %s16, 1
        // Predicated region
        $region13: #{tpu_custom_call.1} parent=11 // pred_check
          %p188 = pneg %p63
        $region14: #{tpu_custom_call.1} parent=11 // pred_check_branch
          %190 = sbr.rel (%p188) target = $region16
        $region15: #{tpu_custom_call.1} parent=11 // pred_region
          %s192 = ssub.s32 512, 512
          %193 = vsyncadd [#allocation7], %s192
          %s194 = sshll.u32 [#allocation6], 4
          %s195 = int_to_ptr.vmem [resolvable:$true] %s194
          %200 = dma.hbm_to_vmem [thread:$0]  %s1, 512, %s195, [#allocation7], 128, 128, 8
        $region16: #{tpu_custom_call.1} parent=11 // pred_fallthru
          _
        // Predicated region
        $region17: #{tpu_custom_call.1} parent=11 // pred_check
          %p201 = pneg %p84
        $region18: #{tpu_custom_call.1} parent=11 // pred_check_branch
          %203 = sbr.rel (%p201) target = $region20
        $region19: #{tpu_custom_call.1} parent=11 // pred_region
          _
        $region20: #{tpu_custom_call.1} parent=11 // pred_fallthru
          _
        // Predicated region
        $region21: #{tpu_custom_call.1} parent=11 // pred_check
          %p204 = pneg %p105
        $region22: #{tpu_custom_call.1} parent=11 // pred_check_branch
          %206 = sbr.rel (%p204) target = $region24
        $region23: #{tpu_custom_call.1} parent=11 // pred_region
          _
        $region24: #{tpu_custom_call.1} parent=11 // pred_fallthru
          _
        // Predicated region
        $region25: #{tpu_custom_call.1} parent=11 // pred_check
          %p207 = pneg %p126
        $region26: #{tpu_custom_call.1} parent=11 // pred_check_branch
          %209 = sbr.rel (%p207) target = $region28
        $region27: #{tpu_custom_call.1} parent=11 // pred_region
          _
        $region28: #{tpu_custom_call.1} parent=11 // pred_fallthru
          _
        // Predicated region
        $region29: #{tpu_custom_call.1} parent=11 // pred_check
          %p210 = pneg %p147
        $region30: #{tpu_custom_call.1} parent=11 // pred_check_branch
          %212 = sbr.rel (%p210) target = $region32
        $region31: #{tpu_custom_call.1} parent=11 // pred_region
          _
        $region32: #{tpu_custom_call.1} parent=11 // pred_fallthru
          _
      $region12: #{tpu_custom_call.1} parent=5 // pred_fallthru
        _
      %p213 = scmp.lt.s32.totalorder %s16, 2
      // Predicated region
      $region33: #{tpu_custom_call.1} parent=5 // pred_check
        %p214 = pneg %p213
      $region34: #{tpu_custom_call.1} parent=5 // pred_check_branch
        %216 = sbr.rel (%p214) target = $region36
      $region35: #{tpu_custom_call.1} parent=5 // pred_region
        // Predicated region
        $region37: #{tpu_custom_call.1} parent=35 // pred_check
          %p217 = pneg %p36
        $region38: #{tpu_custom_call.1} parent=35 // pred_check_branch
          %219 = sbr.rel (%p217) target = $region40
        $region39: #{tpu_custom_call.1} parent=35 // pred_region
          %p220 = scmp.lt.s32.totalorder %s16, 1
          %s221 = scalar_select %p220, %s16, 1
          %s222 = smul.addr %s221, 2
          %s223 = smul.addr %s222, 8
          %s224 = scalar_lea.vmem %s0, %s223
        $region40: #{tpu_custom_call.1} parent=35 // pred_fallthru
          _
      $region36: #{tpu_custom_call.1} parent=5 // pred_fallthru
        _
      %p225 = scmp.le.s32.totalorder 1, %s16
      %p226 = scmp.lt.s32.totalorder %s16, 3
      %p227 = pnand %p225, %p226
      %p228 = pneg %p227
      // Predicated region
      $region41: #{tpu_custom_call.1} parent=5 // pred_check
        _
      $region42: #{tpu_custom_call.1} parent=5 // pred_check_branch
        %230 = sbr.rel (%p227) target = $region44
      $region43: #{tpu_custom_call.1} parent=5 // pred_region
        %s231 = ssub.s32 %s16, 1
        // Predicated region
        $region45: #{tpu_custom_call.1} parent=43 // pred_check
          %p232 = pneg %p63
        $region46: #{tpu_custom_call.1} parent=43 // pred_check_branch
          %234 = sbr.rel (%p232) target = $region48
        $region47: #{tpu_custom_call.1} parent=43 // pred_region
          %235 = dma.done [#allocation7], 512
        $region48: #{tpu_custom_call.1} parent=43 // pred_fallthru
          _
        %p236 = scmp.lt.s32.totalorder %s21, 1
        %s237 = scalar_select %p236, %s21, 1
        %s238 = smul.addr %s237, 2
        %s239 = smul.addr %s238, 8
        %s240 = scalar_lea.vmem %s0, %s239
        %p241 = pneg %p42
        %p242 = pneg %p39
        %p243 = pneg %p63
        %p244 = pneg %p60
        %p245 = pneg %p84
        %p246 = pneg %p81
        %p247 = pneg %p105
        %p248 = pneg %p102
        %p249 = pneg %p126
        %p250 = pneg %p123
        %p251 = pneg %p147
        %p252 = pneg %p144
        %p253 = pneg %p173
        %p254 = pneg %p170
        %s255 = sand.u32 %s160, 1
        %s256 = scalar_lea.sflag [#allocation8], %s255
        %s257 = sand.u32 %s160, 1
        %s258 = smul.addr %s257, 32
        %s259 = scalar_lea.vmem [#allocation9], %s258
        %p260 = scmp.lt.s32.totalorder %s21, 1
        %s261 = scalar_select %p260, %s21, 1
        %s262 = smul.addr %s261, 2
        %s263 = smul.addr %s262, 8
        %s264 = scalar_lea.vmem %s0, %s263
        %265 = vst [vmem:[#allocation3] sm:$0xff] 0.0
        %266 = vst [vmem:[#allocation3 + $0x20] sm:$0xff] 0.0
        %267 = vst [vmem:[#allocation3 + $0x40] sm:$0xff] 0.0
        %268 = vst [vmem:[#allocation3 + $0x60] sm:$0xff] 0.0
        %269 = vst [vmem:[#allocation3 + $0x18] sm:$0xff] 0.0
        %270 = vst [vmem:[#allocation3 + $0x38] sm:$0xff] 0.0
        %271 = vst [vmem:[#allocation3 + $0x58] sm:$0xff] 0.0
        %272 = vst [vmem:[#allocation3 + $0x78] sm:$0xff] 0.0
        %v273 = vld [vmem:[%s5] sm:$0x3]
        %v274 = vadd.s32 %v273, 4294967295
        %vm275 = vcmp.ge.s32.totalorder %v274, 0
        %vm276 = vcmp.lt.s32.totalorder %v274, 16
        %vm277 = vmand %vm275, %vm276
        %v278 = vadd.s32 %v273, 1
        %vm279 = vcmp.ge.s32.totalorder %v278, 0
        %vm280 = vcmp.lt.s32.totalorder %v278, 16
        %vm281 = vmand %vm279, %vm280
        %282 = vst [vmem:[#allocation2] sm:$0xff] 0.0
        %283 = vst [vmem:[#allocation2 + $0x18] sm:$0xff] 0.0
        %v284 = vld [vmem:[%s264] sm:$0xff]
        %v285 = vld [vmem:[%s264 + $0x8] sm:$0xff]
        %286 = vst [vmem:[#allocation2 + $0x8] sm:$0xff] %v284
        %287 = vst [vmem:[#allocation2 + $0x10] sm:$0xff] %v285
        %v288 = vld [vmem:[#allocation2] sm:$0xff]
        %v289 = vld [vmem:[#allocation2 + $0x8] sm:$0xff]
        %v290 = vld [vmem:[#allocation2 + $0x10] sm:$0xff]
        %v291 = vsel %vm277, 1, 0
        %v292 = vlaneseq
        %v293 = vshrl.u32 %v292, 7
        %v294 = vsub.s32 0, %v293
        %v295 = vrot.slane %v291, %v294
        %v296 = vlaneseq
        %v297 = vshrl.u32 %v296, 7
        %v298 = vsub.s32 1, %v297
        %v299 = vrot.slane %v291, %v298
        %vm300 = vcmp.eq.s32.totalorder %v295, 1
        %vm301 = vcmp.eq.s32.totalorder %v299, 1
        %305 = vrot.lane.b32.xlu0 %v288, 17
        %v306 = vpop.permute.xlu0 %305
        %307 = vrot.lane.b32.xlu0 %v289, 17
        %v308 = vpop.permute.xlu0 %307
        %309 = vrot.lane.b32.xlu0 %v290, 17
        %v310 = vpop.permute.xlu0 %309
        %vm311 = vcmask 138240
        %v312 = vsel %vm311, %v306, %v308
        %v313 = vsel %vm311, %v308, %v310
        %v316 = vsel %vm300, %v312, 0.0
        %v317 = vsel %vm301, %v313, 0.0
        %318 = vst [vmem:[#allocation4] sm:$0xff] %v316
        %319 = vst [vmem:[#allocation4 + $0x8] sm:$0xff] %v317
        %v320 = vld [vmem:[#allocation2] sm:$0xff]
        %v321 = vld [vmem:[#allocation2 + $0x8] sm:$0xff]
        %v322 = vld [vmem:[#allocation2 + $0x10] sm:$0xff]
        %326 = vrot.lane.b32.xlu0 %v320, 16
        %v327 = vpop.permute.xlu0 %326
        %328 = vrot.lane.b32.xlu0 %v321, 16
        %v329 = vpop.permute.xlu0 %328
        %330 = vrot.lane.b32.xlu0 %v322, 16
        %v331 = vpop.permute.xlu0 %330
        %vm332 = vcmask 130048
        %v333 = vsel %vm332, %v327, %v329
        %v334 = vsel %vm332, %v329, %v331
        %337 = vst [vmem:[#allocation4 + $0x10] sm:$0xff] %v333
        %338 = vst [vmem:[#allocation4 + $0x18] sm:$0xff] %v334
        %v339 = vld [vmem:[#allocation2] sm:$0xff]
        %v340 = vld [vmem:[#allocation2 + $0x8] sm:$0xff]
        %v341 = vld [vmem:[#allocation2 + $0x10] sm:$0xff]
        %v342 = vsel %vm281, 1, 0
        %v343 = vlaneseq
        %v344 = vshrl.u32 %v343, 7
        %v345 = vsub.s32 0, %v344
        %v346 = vrot.slane %v342, %v345
        %v347 = vlaneseq
        %v348 = vshrl.u32 %v347, 7
        %v349 = vsub.s32 1, %v348
        %v350 = vrot.slane %v342, %v349
        %vm351 = vcmp.eq.s32.totalorder %v346, 1
        %vm352 = vcmp.eq.s32.totalorder %v350, 1
        %356 = vrot.lane.b32.xlu0 %v339, 15
        %v357 = vpop.permute.xlu0 %356
        %358 = vrot.lane.b32.xlu0 %v340, 15
        %v359 = vpop.permute.xlu0 %358
        %360 = vrot.lane.b32.xlu0 %v341, 15
        %v361 = vpop.permute.xlu0 %360
        %vm362 = vcmask 121856
        %v363 = vsel %vm362, %v357, %v359
        %v364 = vsel %vm362, %v359, %v361
        %v367 = vsel %vm351, %v363, 0.0
        %v368 = vsel %vm352, %v364, 0.0
        %369 = vst [vmem:[#allocation4 + $0x20] sm:$0xff] %v367
        %370 = vst [vmem:[#allocation4 + $0x28] sm:$0xff] %v368
        %v371 = vld [vmem:[#allocation2] sm:$0xff]
        %v372 = vld [vmem:[#allocation2 + $0x8] sm:$0xff]
        %v373 = vld [vmem:[#allocation2 + $0x10] sm:$0xff]
        %377 = vrot.lane.b32.xlu0 %v371, 1
        %v378 = vpop.permute.xlu0 %377
        %379 = vrot.lane.b32.xlu0 %v372, 1
        %v380 = vpop.permute.xlu0 %379
        %381 = vrot.lane.b32.xlu0 %v373, 1
        %v382 = vpop.permute.xlu0 %381
        %vm383 = vcmask 7168
        %v384 = vsel %vm383, %v378, %v380
        %v385 = vsel %vm383, %v380, %v382
        %v388 = vsel %vm300, %v384, 0.0
        %v389 = vsel %vm301, %v385, 0.0
        %390 = vst [vmem:[#allocation4 + $0x30] sm:$0xff] %v388
        %391 = vst [vmem:[#allocation4 + $0x38] sm:$0xff] %v389
        %v392 = vld [vmem:[#allocation2 + $0x8] sm:$0xff]
        %v393 = vld [vmem:[#allocation2 + $0x10] sm:$0xff]
        %394 = vst [vmem:[#allocation4 + $0x40] sm:$0xff] %v392
        %395 = vst [vmem:[#allocation4 + $0x48] sm:$0xff] %v393
        %v396 = vld [vmem:[#allocation2 + $0x8] sm:$0xff]
        %v397 = vld [vmem:[#allocation2 + $0x10] sm:$0xff]
        %v398 = vld [vmem:[#allocation2 + $0x18] sm:$0xff]
        %402 = vrot.lane.b32.xlu0 %v396, 127
        %v403 = vpop.permute.xlu0 %402
        %404 = vrot.lane.b32.xlu0 %v397, 127
        %v405 = vpop.permute.xlu0 %404
        %406 = vrot.lane.b32.xlu0 %v398, 127
        %v407 = vpop.permute.xlu0 %406
        %vm408 = vcmask 1039360
        %v409 = vsel %vm408, %v403, %v405
        %v410 = vsel %vm408, %v405, %v407
        %v413 = vsel %vm351, %v409, 0.0
        %v414 = vsel %vm352, %v410, 0.0
        %415 = vst [vmem:[#allocation4 + $0x50] sm:$0xff] %v413
        %416 = vst [vmem:[#allocation4 + $0x58] sm:$0xff] %v414
        %v417 = vld [vmem:[#allocation2 + $0x8] sm:$0xff]
        %v418 = vld [vmem:[#allocation2 + $0x10] sm:$0xff]
        %v419 = vld [vmem:[#allocation2 + $0x18] sm:$0xff]
        %423 = vrot.lane.b32.xlu0 %v417, 113
        %v424 = vpop.permute.xlu0 %423
        %425 = vrot.lane.b32.xlu0 %v418, 113
        %v426 = vpop.permute.xlu0 %425
        %427 = vrot.lane.b32.xlu0 %v419, 113
        %v428 = vpop.permute.xlu0 %427
        %vm429 = vcmask 924672
        %v430 = vsel %vm429, %v424, %v426
        %v431 = vsel %vm429, %v426, %v428
        %v434 = vsel %vm300, %v430, 0.0
        %v435 = vsel %vm301, %v431, 0.0
        %436 = vst [vmem:[#allocation4 + $0x60] sm:$0xff] %v434
        %437 = vst [vmem:[#allocation4 + $0x68] sm:$0xff] %v435
        %v438 = vld [vmem:[#allocation2 + $0x8] sm:$0xff]
        %v439 = vld [vmem:[#allocation2 + $0x10] sm:$0xff]
        %v440 = vld [vmem:[#allocation2 + $0x18] sm:$0xff]
        %444 = vrot.lane.b32.xlu0 %v438, 112
        %v445 = vpop.permute.xlu0 %444
        %446 = vrot.lane.b32.xlu0 %v439, 112
        %v447 = vpop.permute.xlu0 %446
        %448 = vrot.lane.b32.xlu0 %v440, 112
        %v449 = vpop.permute.xlu0 %448
        %vm450 = vcmask 916480
        %v451 = vsel %vm450, %v445, %v447
        %v452 = vsel %vm450, %v447, %v449
        %455 = vst [vmem:[#allocation4 + $0x70] sm:$0xff] %v451
        %456 = vst [vmem:[#allocation4 + $0x78] sm:$0xff] %v452
        %v457 = vld [vmem:[#allocation2 + $0x8] sm:$0xff]
        %v458 = vld [vmem:[#allocation2 + $0x10] sm:$0xff]
        %v459 = vld [vmem:[#allocation2 + $0x18] sm:$0xff]
        %463 = vrot.lane.b32.xlu0 %v457, 111
        %v464 = vpop.permute.xlu0 %463
        %465 = vrot.lane.b32.xlu0 %v458, 111
        %v466 = vpop.permute.xlu0 %465
        %467 = vrot.lane.b32.xlu0 %v459, 111
        %v468 = vpop.permute.xlu0 %467
        %vm469 = vcmask 908288
        %v470 = vsel %vm469, %v464, %v466
        %v471 = vsel %vm469, %v466, %v468
        %v474 = vsel %vm351, %v470, 0.0
        %v475 = vsel %vm352, %v471, 0.0
        %476 = vst [vmem:[#allocation4 + $0x80] sm:$0xff] %v474
        %477 = vst [vmem:[#allocation4 + $0x88] sm:$0xff] %v475
        %v478 = vld [vmem:[#allocation6] sm:$0xff]
        %v479 = vld [vmem:[#allocation6 + $0x8] sm:$0xff]
        %v480 = vld [vmem:[#allocation6 + $0x10] sm:$0xff]
        %v481 = vld [vmem:[#allocation6 + $0x18] sm:$0xff]
        %v482 = vld [vmem:[#allocation4] sm:$0xff]
        %v483 = vld [vmem:[#allocation4 + $0x8] sm:$0xff]
        %v484 = vld [vmem:[#allocation4 + $0x10] sm:$0xff]
        %v485 = vld [vmem:[#allocation4 + $0x18] sm:$0xff]
        %v486 = vld [vmem:[#allocation4 + $0x20] sm:$0xff]
        %v487 = vld [vmem:[#allocation4 + $0x28] sm:$0xff]
        %v488 = vld [vmem:[#allocation4 + $0x30] sm:$0xff]
        %v489 = vld [vmem:[#allocation4 + $0x38] sm:$0xff]
        %v490 = vld [vmem:[#allocation4 + $0x40] sm:$0xff]
        %v491 = vld [vmem:[#allocation4 + $0x48] sm:$0xff]
        %v492 = vld [vmem:[#allocation4 + $0x50] sm:$0xff]
        %v493 = vld [vmem:[#allocation4 + $0x58] sm:$0xff]
        %v494 = vld [vmem:[#allocation4 + $0x60] sm:$0xff]
        %v495 = vld [vmem:[#allocation4 + $0x68] sm:$0xff]
        %v496 = vld [vmem:[#allocation4 + $0x70] sm:$0xff]
        %v497 = vld [vmem:[#allocation4 + $0x78] sm:$0xff]
        %v498 = vld [vmem:[#allocation4 + $0x80] sm:$0xff]
        %v499 = vld [vmem:[#allocation4 + $0x88] sm:$0xff]
        %v500 = vld [vmem:[%s2] sm:$0xff]
        %v501 = vld [vmem:[%s2 + $0x8] sm:$0xff]
        %v502 = vld [vmem:[%s2 + $0x10] sm:$0xff]
        %v503 = vld [vmem:[%s2 + $0x18] sm:$0xff]
        %505 = vset.pattern.permute.xlu0 0
        %506 = vperm.xlu0 %505, %v500
        %v507 = vpop.permute.xlu0 %506
        %510 = vset.pattern.permute.xlu0 0
        %511 = vperm.xlu0 %510, %v501
        %v512 = vpop.permute.xlu0 %511
        %515 = vset.pattern.permute.xlu0 0
        %516 = vperm.xlu0 %515, %v502
        %v517 = vpop.permute.xlu0 %516
        %520 = vset.pattern.permute.xlu0 0
        %521 = vperm.xlu0 %520, %v503
        %v522 = vpop.permute.xlu0 %521
        %vm524 = vcmask 588800
        %v526 = vsel %vm524, %v478, 0
        %v529 = vsel %vm524, %v479, 0
        %v532 = vsel %vm524, %v480, 0
        %v535 = vsel %vm524, %v481, 0
        %537 = vmatprep.subr.mxu0 0.0
        %538 = vmatpush1.msra.mxu0 0.0
        %539 = vmatprep.subr.mxu0 0.0
        %540 = vmatpush1.msra.mxu0 0.0
        %541 = vmatprep.subr.mxu0 0.0
        %542 = vmatpush1.msra.mxu0 0.0
        %543 = vmatprep.subr.mxu0 0.0
        %544 = vmatpush1.msra.mxu0 0.0
        %545 = vmatprep.subr.mxu0 0.0
        %546 = vmatpush1.msra.mxu0 0.0
        %547 = vmatprep.subr.mxu0 0.0
        %548 = vmatpush1.msra.mxu0 0.0
        %549 = vmatprep.subr.mxu0 0.0
        %550 = vmatpush1.msra.mxu0 0.0
        %551 = vmatprep.subr.mxu0 %v499
        %552 = vmatpush1.msra.mxu0 %v498
        %553 = vmatprep.subr.mxu0 %v497
        %554 = vmatpush1.msra.mxu0 %v496
        %555 = vmatprep.subr.mxu0 %v495
        %556 = vmatpush1.msra.mxu0 %v494
        %557 = vmatprep.subr.mxu0 %v493
        %558 = vmatpush1.msra.mxu0 %v492
        %559 = vmatprep.subr.mxu0 %v491
        %560 = vmatpush1.msra.mxu0 %v490
        %561 = vmatprep.subr.mxu0 %v489
        %562 = vmatpush1.msra.mxu0 %v488
        %563 = vmatprep.subr.mxu0 %v487
        %564 = vmatpush1.msra.mxu0 %v486
        %565 = vmatprep.subr.mxu0 %v485
        %566 = vmatpush1.msra.mxu0 %v484
        %567 = vmatprep.subr.mxu0 %v483
        %568 = vmatpush1.msra.mxu0 %v482
        %569 = vmatprep.subr.mxu0 0.0
        %570 = vmatpush2.msra.mxu0 0.0
        %571 = vmatprep.subr.mxu0 0.0
        %572 = vmatpush2.msra.mxu0 0.0
        %573 = vmatprep.subr.mxu0 0.0
        %574 = vmatpush2.msra.mxu0 0.0
        %575 = vmatprep.subr.mxu0 0.0
        %576 = vmatpush2.msra.mxu0 0.0
        %577 = vmatprep.subr.mxu0 0.0
        %578 = vmatpush2.msra.mxu0 0.0
        %579 = vmatprep.subr.mxu0 0.0
        %580 = vmatpush2.msra.mxu0 0.0
        %581 = vmatprep.subr.mxu0 0.0
        %582 = vmatpush2.msra.mxu0 0.0
        %583 = vmatprep.subr.mxu0 0.0
        %584 = vmatpush2.msra.mxu0 0.0
        %585 = vmatprep.subr.mxu0 0.0
        %586 = vmatpush2.msra.mxu0 0.0
        %587 = vmatprep.subr.mxu0 0.0
        %588 = vmatpush2.msra.mxu0 0.0
        %589 = vmatprep.subr.mxu0 0.0
        %590 = vmatpush2.msra.mxu0 0.0
        %591 = vmatprep.subr.mxu0 0.0
        %592 = vmatpush2.msra.mxu0 0.0
        %593 = vmatprep.subr.mxu0 0.0
        %594 = vmatpush2.msra.mxu0 0.0
        %595 = vmatprep.subr.mxu0 0.0
        %596 = vmatpush2.msra.mxu0 0.0
        %597 = vmatprep.subr.mxu0 0.0
        %598 = vmatpush2.msra.mxu0 0.0
        %599 = vmatprep.subr.mxu0 0.0
        %600 = vmatpush2.msra.mxu0 0.0
        %601 = vmatprep.mubr.f32.mxu0 0.0
        %602 = vmatmul.mubr.f32.gmra.mxu0 %v526
        %v603 = vpop.f32.mrf.mxu0
        %v604 = vadd.f32 %v507, %v603
        %v605 = vpop.f32.mrf.mxu0
        %v606 = vadd.f32 %v507, %v605
        %607 = vmatprep.mubr.f32.mxu0 0.0
        %608 = vmatmul.mubr.f32.gmra.mxu0 %v529
        %v609 = vpop.f32.mrf.mxu0
        %v610 = vadd.f32 %v512, %v609
        %v611 = vpop.f32.mrf.mxu0
        %v612 = vadd.f32 %v512, %v611
        %613 = vmatprep.mubr.f32.mxu0 0.0
        %614 = vmatmul.mubr.f32.gmra.mxu0 %v532
        %v615 = vpop.f32.mrf.mxu0
        %v616 = vadd.f32 %v517, %v615
        %v617 = vpop.f32.mrf.mxu0
        %v618 = vadd.f32 %v517, %v617
        %619 = vmatprep.mubr.f32.mxu0 0.0
        %620 = vmatmul.mubr.f32.gmra.mxu0 %v535
        %v621 = vpop.f32.mrf.mxu0
        %v622 = vadd.f32 %v522, %v621
        %v623 = vpop.f32.mrf.mxu0
        %v624 = vadd.f32 %v522, %v623
        %625 = vdwg.mxu0
        %626 = vst [vmem:[#allocation3 + $0x8] sm:$0xff] %v604
        %627 = vst [vmem:[#allocation3 + $0x10] sm:$0xff] %v606
        %628 = vst [vmem:[#allocation3 + $0x28] sm:$0xff] %v610
        %629 = vst [vmem:[#allocation3 + $0x30] sm:$0xff] %v612
        %630 = vst [vmem:[#allocation3 + $0x48] sm:$0xff] %v616
        %631 = vst [vmem:[#allocation3 + $0x50] sm:$0xff] %v618
        %632 = vst [vmem:[#allocation3 + $0x68] sm:$0xff] %v622
        %633 = vst [vmem:[#allocation3 + $0x70] sm:$0xff] %v624
        %v634 = vld [vmem:[#allocation3 + $0x60] sm:$0xff]
        %v635 = vld [vmem:[#allocation3 + $0x68] sm:$0xff]
        %v636 = vld [vmem:[#allocation3 + $0x70] sm:$0xff]
        %640 = vrot.lane.b32.xlu0 %v634, 17
        %v641 = vpop.permute.xlu0 %640
        %642 = vrot.lane.b32.xlu0 %v635, 17
        %v643 = vpop.permute.xlu0 %642
        %644 = vrot.lane.b32.xlu0 %v636, 17
        %v645 = vpop.permute.xlu0 %644
        %v646 = vsel %vm311, %v641, %v643
        %v647 = vsel %vm311, %v643, %v645
        %v650 = vsel %vm300, %v646, 0.0
        %v651 = vsel %vm301, %v647, 0.0
        %652 = vst [vmem:[#allocation5] sm:$0xff] %v650
        %653 = vst [vmem:[#allocation5 + $0x8] sm:$0xff] %v651
        %v654 = vld [vmem:[#allocation3 + $0x40] sm:$0xff]
        %v655 = vld [vmem:[#allocation3 + $0x48] sm:$0xff]
        %v656 = vld [vmem:[#allocation3 + $0x50] sm:$0xff]
        %660 = vrot.lane.b32.xlu0 %v654, 16
        %v661 = vpop.permute.xlu0 %660
        %662 = vrot.lane.b32.xlu0 %v655, 16
        %v663 = vpop.permute.xlu0 %662
        %664 = vrot.lane.b32.xlu0 %v656, 16
        %v665 = vpop.permute.xlu0 %664
        %v666 = vsel %vm332, %v661, %v663
        %v667 = vsel %vm332, %v663, %v665
        %670 = vst [vmem:[#allocation5 + $0x10] sm:$0xff] %v666
        %671 = vst [vmem:[#allocation5 + $0x18] sm:$0xff] %v667
        %v672 = vld [vmem:[#allocation3 + $0x60] sm:$0xff]
        %v673 = vld [vmem:[#allocation3 + $0x68] sm:$0xff]
        %v674 = vld [vmem:[#allocation3 + $0x70] sm:$0xff]
        %678 = vrot.lane.b32.xlu0 %v672, 16
        %v679 = vpop.permute.xlu0 %678
        %680 = vrot.lane.b32.xlu0 %v673, 16
        %v681 = vpop.permute.xlu0 %680
        %682 = vrot.lane.b32.xlu0 %v674, 16
        %v683 = vpop.permute.xlu0 %682
        %v684 = vsel %vm332, %v679, %v681
        %v685 = vsel %vm332, %v681, %v683
        %688 = vst [vmem:[#allocation5 + $0x20] sm:$0xff] %v684
        %689 = vst [vmem:[#allocation5 + $0x28] sm:$0xff] %v685
        %v690 = vld [vmem:[#allocation3 + $0x40] sm:$0xff]
        %v691 = vld [vmem:[#allocation3 + $0x48] sm:$0xff]
        %v692 = vld [vmem:[#allocation3 + $0x50] sm:$0xff]
        %696 = vrot.lane.b32.xlu0 %v690, 15
        %v697 = vpop.permute.xlu0 %696
        %698 = vrot.lane.b32.xlu0 %v691, 15
        %v699 = vpop.permute.xlu0 %698
        %700 = vrot.lane.b32.xlu0 %v692, 15
        %v701 = vpop.permute.xlu0 %700
        %v702 = vsel %vm362, %v697, %v699
        %v703 = vsel %vm362, %v699, %v701
        %v706 = vsel %vm351, %v702, 0.0
        %v707 = vsel %vm352, %v703, 0.0
        %708 = vst [vmem:[#allocation5 + $0x30] sm:$0xff] %v706
        %709 = vst [vmem:[#allocation5 + $0x38] sm:$0xff] %v707
        %v710 = vld [vmem:[#allocation3 + $0x20] sm:$0xff]
        %v711 = vld [vmem:[#allocation3 + $0x28] sm:$0xff]
        %v712 = vld [vmem:[#allocation3 + $0x30] sm:$0xff]
        %716 = vrot.lane.b32.xlu0 %v710, 1
        %v717 = vpop.permute.xlu0 %716
        %718 = vrot.lane.b32.xlu0 %v711, 1
        %v719 = vpop.permute.xlu0 %718
        %720 = vrot.lane.b32.xlu0 %v712, 1
        %v721 = vpop.permute.xlu0 %720
        %v722 = vsel %vm383, %v717, %v719
        %v723 = vsel %vm383, %v719, %v721
        %v726 = vsel %vm300, %v722, 0.0
        %v727 = vsel %vm301, %v723, 0.0
        %728 = vst [vmem:[#allocation5 + $0x40] sm:$0xff] %v726
        %729 = vst [vmem:[#allocation5 + $0x48] sm:$0xff] %v727
        %v730 = vld [vmem:[#allocation3 + $0x8] sm:$0xff]
        %v731 = vld [vmem:[#allocation3 + $0x10] sm:$0xff]
        %732 = vst [vmem:[#allocation5 + $0x50] sm:$0xff] %v730
        %733 = vst [vmem:[#allocation5 + $0x58] sm:$0xff] %v731
        %v734 = vld [vmem:[#allocation3 + $0x28] sm:$0xff]
        %v735 = vld [vmem:[#allocation3 + $0x30] sm:$0xff]
        %736 = vst [vmem:[#allocation5 + $0x60] sm:$0xff] %v734
        %737 = vst [vmem:[#allocation5 + $0x68] sm:$0xff] %v735
        %v738 = vld [vmem:[#allocation3 + $0x8] sm:$0xff]
        %v739 = vld [vmem:[#allocation3 + $0x10] sm:$0xff]
        %v740 = vld [vmem:[#allocation3 + $0x18] sm:$0xff]
        %744 = vrot.lane.b32.xlu0 %v738, 127
        %v745 = vpop.permute.xlu0 %744
        %746 = vrot.lane.b32.xlu0 %v739, 127
        %v747 = vpop.permute.xlu0 %746
        %748 = vrot.lane.b32.xlu0 %v740, 127
        %v749 = vpop.permute.xlu0 %748
        %v750 = vsel %vm408, %v745, %v747
        %v751 = vsel %vm408, %v747, %v749
        %v754 = vsel %vm351, %v750, 0.0
        %v755 = vsel %vm352, %v751, 0.0
        %756 = vst [vmem:[#allocation5 + $0x70] sm:$0xff] %v754
        %757 = vst [vmem:[#allocation5 + $0x78] sm:$0xff] %v755
        %v758 = vld [vmem:[#allocation3 + $0x60] sm:$0xff]
        %v759 = vld [vmem:[#allocation3 + $0x68] sm:$0xff]
        %v760 = vld [vmem:[#allocation3 + $0x70] sm:$0xff]
        %764 = vrot.lane.b32.xlu0 %v758, 1
        %v765 = vpop.permute.xlu0 %764
        %766 = vrot.lane.b32.xlu0 %v759, 1
        %v767 = vpop.permute.xlu0 %766
        %768 = vrot.lane.b32.xlu0 %v760, 1
        %v769 = vpop.permute.xlu0 %768
        %v770 = vsel %vm383, %v765, %v767
        %v771 = vsel %vm383, %v767, %v769
        %v774 = vsel %vm300, %v770, 0.0
        %v775 = vsel %vm301, %v771, 0.0
        %776 = vst [vmem:[#allocation5 + $0x80] sm:$0xff] %v774
        %777 = vst [vmem:[#allocation5 + $0x88] sm:$0xff] %v775
        %v778 = vld [vmem:[#allocation3 + $0x48] sm:$0xff]
        %v779 = vld [vmem:[#allocation3 + $0x50] sm:$0xff]
        %780 = vst [vmem:[#allocation5 + $0x90] sm:$0xff] %v778
        %781 = vst [vmem:[#allocation5 + $0x98] sm:$0xff] %v779
        %v782 = vld [vmem:[#allocation3 + $0x68] sm:$0xff]
        %v783 = vld [vmem:[#allocation3 + $0x70] sm:$0xff]
        %784 = vst [vmem:[#allocation5 + $0xa0] sm:$0xff] %v782
        %785 = vst [vmem:[#allocation5 + $0xa8] sm:$0xff] %v783
        %v786 = vld [vmem:[#allocation3 + $0x48] sm:$0xff]
        %v787 = vld [vmem:[#allocation3 + $0x50] sm:$0xff]
        %v788 = vld [vmem:[#allocation3 + $0x58] sm:$0xff]
        %792 = vrot.lane.b32.xlu0 %v786, 127
        %v793 = vpop.permute.xlu0 %792
        %794 = vrot.lane.b32.xlu0 %v787, 127
        %v795 = vpop.permute.xlu0 %794
        %796 = vrot.lane.b32.xlu0 %v788, 127
        %v797 = vpop.permute.xlu0 %796
        %v798 = vsel %vm408, %v793, %v795
        %v799 = vsel %vm408, %v795, %v797
        %v802 = vsel %vm351, %v798, 0.0
        %v803 = vsel %vm352, %v799, 0.0
        %804 = vst [vmem:[#allocation5 + $0xb0] sm:$0xff] %v802
        %805 = vst [vmem:[#allocation5 + $0xb8] sm:$0xff] %v803
        %v806 = vld [vmem:[#allocation3 + $0x28] sm:$0xff]
        %v807 = vld [vmem:[#allocation3 + $0x30] sm:$0xff]
        %v808 = vld [vmem:[#allocation3 + $0x38] sm:$0xff]
        %812 = vrot.lane.b32.xlu0 %v806, 113
        %v813 = vpop.permute.xlu0 %812
        %814 = vrot.lane.b32.xlu0 %v807, 113
        %v815 = vpop.permute.xlu0 %814
        %816 = vrot.lane.b32.xlu0 %v808, 113
        %v817 = vpop.permute.xlu0 %816
        %v818 = vsel %vm429, %v813, %v815
        %v819 = vsel %vm429, %v815, %v817
        %v822 = vsel %vm300, %v818, 0.0
        %v823 = vsel %vm301, %v819, 0.0
        %824 = vst [vmem:[#allocation5 + $0xc0] sm:$0xff] %v822
        %825 = vst [vmem:[#allocation5 + $0xc8] sm:$0xff] %v823
        %v826 = vld [vmem:[#allocation3 + $0x8] sm:$0xff]
        %v827 = vld [vmem:[#allocation3 + $0x10] sm:$0xff]
        %v828 = vld [vmem:[#allocation3 + $0x18] sm:$0xff]
        %832 = vrot.lane.b32.xlu0 %v826, 112
        %v833 = vpop.permute.xlu0 %832
        %834 = vrot.lane.b32.xlu0 %v827, 112
        %v835 = vpop.permute.xlu0 %834
        %836 = vrot.lane.b32.xlu0 %v828, 112
        %v837 = vpop.permute.xlu0 %836
        %v838 = vsel %vm450, %v833, %v835
        %v839 = vsel %vm450, %v835, %v837
        %842 = vst [vmem:[#allocation5 + $0xd0] sm:$0xff] %v838
        %843 = vst [vmem:[#allocation5 + $0xd8] sm:$0xff] %v839
        %v844 = vld [vmem:[#allocation3 + $0x28] sm:$0xff]
        %v845 = vld [vmem:[#allocation3 + $0x30] sm:$0xff]
        %v846 = vld [vmem:[#allocation3 + $0x38] sm:$0xff]
        %850 = vrot.lane.b32.xlu0 %v844, 112
        %v851 = vpop.permute.xlu0 %850
        %852 = vrot.lane.b32.xlu0 %v845, 112
        %v853 = vpop.permute.xlu0 %852
        %854 = vrot.lane.b32.xlu0 %v846, 112
        %v855 = vpop.permute.xlu0 %854
        %v856 = vsel %vm450, %v851, %v853
        %v857 = vsel %vm450, %v853, %v855
        %860 = vst [vmem:[#allocation5 + $0xe0] sm:$0xff] %v856
        %861 = vst [vmem:[#allocation5 + $0xe8] sm:$0xff] %v857
        %v862 = vld [vmem:[#allocation3 + $0x8] sm:$0xff]
        %v863 = vld [vmem:[#allocation3 + $0x10] sm:$0xff]
        %v864 = vld [vmem:[#allocation3 + $0x18] sm:$0xff]
        %868 = vrot.lane.b32.xlu0 %v862, 111
        %v869 = vpop.permute.xlu0 %868
        %870 = vrot.lane.b32.xlu0 %v863, 111
        %v871 = vpop.permute.xlu0 %870
        %872 = vrot.lane.b32.xlu0 %v864, 111
        %v873 = vpop.permute.xlu0 %872
        %v874 = vsel %vm469, %v869, %v871
        %v875 = vsel %vm469, %v871, %v873
        %v878 = vsel %vm351, %v874, 0.0
        %v879 = vsel %vm352, %v875, 0.0
        %880 = vst [vmem:[#allocation5 + $0xf0] sm:$0xff] %v878
        %881 = vst [vmem:[#allocation5 + $0xf8] sm:$0xff] %v879
        %v882 = vld [vmem:[%s3] sm:$0xff]
        %v883 = vld [vmem:[%s3 + $0x8] sm:$0xff]
        %v884 = vld [vmem:[#allocation5] sm:$0xff]
        %v885 = vld [vmem:[#allocation5 + $0x8] sm:$0xff]
        %v886 = vld [vmem:[#allocation5 + $0x10] sm:$0xff]
        %v887 = vld [vmem:[#allocation5 + $0x18] sm:$0xff]
        %v888 = vld [vmem:[#allocation5 + $0x20] sm:$0xff]
        %v889 = vld [vmem:[#allocation5 + $0x28] sm:$0xff]
        %v890 = vld [vmem:[#allocation5 + $0x30] sm:$0xff]
        %v891 = vld [vmem:[#allocation5 + $0x38] sm:$0xff]
        %v892 = vld [vmem:[#allocation5 + $0x40] sm:$0xff]
        %v893 = vld [vmem:[#allocation5 + $0x48] sm:$0xff]
        %v894 = vld [vmem:[#allocation5 + $0x50] sm:$0xff]
        %v895 = vld [vmem:[#allocation5 + $0x58] sm:$0xff]
        %v896 = vld [vmem:[#allocation5 + $0x60] sm:$0xff]
        %v897 = vld [vmem:[#allocation5 + $0x68] sm:$0xff]
        %v898 = vld [vmem:[#allocation5 + $0x70] sm:$0xff]
        %v899 = vld [vmem:[#allocation5 + $0x78] sm:$0xff]
        %v900 = vld [vmem:[#allocation5 + $0x80] sm:$0xff]
        %v901 = vld [vmem:[#allocation5 + $0x88] sm:$0xff]
        %v902 = vld [vmem:[#allocation5 + $0x90] sm:$0xff]
        %v903 = vld [vmem:[#allocation5 + $0x98] sm:$0xff]
        %v904 = vld [vmem:[#allocation5 + $0xa0] sm:$0xff]
        %v905 = vld [vmem:[#allocation5 + $0xa8] sm:$0xff]
        %v906 = vld [vmem:[#allocation5 + $0xb0] sm:$0xff]
        %v907 = vld [vmem:[#allocation5 + $0xb8] sm:$0xff]
        %v908 = vld [vmem:[#allocation5 + $0xc0] sm:$0xff]
        %v909 = vld [vmem:[#allocation5 + $0xc8] sm:$0xff]
        %v910 = vld [vmem:[#allocation5 + $0xd0] sm:$0xff]
        %v911 = vld [vmem:[#allocation5 + $0xd8] sm:$0xff]
        %v912 = vld [vmem:[#allocation5 + $0xe0] sm:$0xff]
        %v913 = vld [vmem:[#allocation5 + $0xe8] sm:$0xff]
        %v914 = vld [vmem:[#allocation5 + $0xf0] sm:$0xff]
        %v915 = vld [vmem:[#allocation5 + $0xf8] sm:$0xff]
        %v916 = vld [vmem:[%s4] sm:$0xff]
        %v917 = vld [vmem:[%s4 + $0x8] sm:$0xff]
        %919 = vset.pattern.permute.xlu0 0
        %920 = vperm.xlu0 %919, %v916
        %v921 = vpop.permute.xlu0 %920
        %924 = vset.pattern.permute.xlu0 0
        %925 = vperm.xlu0 %924, %v917
        %v926 = vpop.permute.xlu0 %925
        %928 = vmatprep.subr.mxu0 %v915
        %929 = vmatpush1.msra.mxu0 %v914
        %930 = vmatprep.subr.mxu0 %v913
        %931 = vmatpush1.msra.mxu0 %v912
        %932 = vmatprep.subr.mxu0 %v911
        %933 = vmatpush1.msra.mxu0 %v910
        %934 = vmatprep.subr.mxu0 %v909
        %935 = vmatpush1.msra.mxu0 %v908
        %936 = vmatprep.subr.mxu0 %v907
        %937 = vmatpush1.msra.mxu0 %v906
        %938 = vmatprep.subr.mxu0 %v905
        %939 = vmatpush1.msra.mxu0 %v904
        %940 = vmatprep.subr.mxu0 %v903
        %941 = vmatpush1.msra.mxu0 %v902
        %942 = vmatprep.subr.mxu0 %v901
        %943 = vmatpush1.msra.mxu0 %v900
        %944 = vmatprep.subr.mxu0 %v899
        %945 = vmatpush1.msra.mxu0 %v898
        %946 = vmatprep.subr.mxu0 %v897
        %947 = vmatpush1.msra.mxu0 %v896
        %948 = vmatprep.subr.mxu0 %v895
        %949 = vmatpush1.msra.mxu0 %v894
        %950 = vmatprep.subr.mxu0 %v893
        %951 = vmatpush1.msra.mxu0 %v892
        %952 = vmatprep.subr.mxu0 %v891
        %953 = vmatpush1.msra.mxu0 %v890
        %954 = vmatprep.subr.mxu0 %v889
        %955 = vmatpush1.msra.mxu0 %v888
        %956 = vmatprep.subr.mxu0 %v887
        %957 = vmatpush1.msra.mxu0 %v886
        %958 = vmatprep.subr.mxu0 %v885
        %959 = vmatpush1.msra.mxu0 %v884
        %960 = vmatprep.subr.mxu0 0.0
        %961 = vmatpush2.msra.mxu0 0.0
        %962 = vmatprep.subr.mxu0 0.0
        %963 = vmatpush2.msra.mxu0 0.0
        %964 = vmatprep.subr.mxu0 0.0
        %965 = vmatpush2.msra.mxu0 0.0
        %966 = vmatprep.subr.mxu0 0.0
        %967 = vmatpush2.msra.mxu0 0.0
        %968 = vmatprep.subr.mxu0 0.0
        %969 = vmatpush2.msra.mxu0 0.0
        %970 = vmatprep.subr.mxu0 0.0
        %971 = vmatpush2.msra.mxu0 0.0
        %972 = vmatprep.subr.mxu0 0.0
        %973 = vmatpush2.msra.mxu0 0.0
        %974 = vmatprep.subr.mxu0 0.0
        %975 = vmatpush2.msra.mxu0 0.0
        %976 = vmatprep.subr.mxu0 0.0
        %977 = vmatpush2.msra.mxu0 0.0
        %978 = vmatprep.subr.mxu0 0.0
        %979 = vmatpush2.msra.mxu0 0.0
        %980 = vmatprep.subr.mxu0 0.0
        %981 = vmatpush2.msra.mxu0 0.0
        %982 = vmatprep.subr.mxu0 0.0
        %983 = vmatpush2.msra.mxu0 0.0
        %984 = vmatprep.subr.mxu0 0.0
        %985 = vmatpush2.msra.mxu0 0.0
        %986 = vmatprep.subr.mxu0 0.0
        %987 = vmatpush2.msra.mxu0 0.0
        %988 = vmatprep.subr.mxu0 0.0
        %989 = vmatpush2.msra.mxu0 0.0
        %990 = vmatprep.subr.mxu0 0.0
        %991 = vmatpush2.msra.mxu0 0.0
        %992 = vmatprep.mubr.f32.mxu0 0.0
        %993 = vmatmul.mubr.f32.gmra.mxu0 %v882
        %v994 = vpop.f32.mrf.mxu0
        %v995 = vadd.f32 %v921, %v994
        %v996 = vpop.f32.mrf.mxu0
        %v997 = vadd.f32 %v921, %v996
        %998 = vmatprep.mubr.f32.mxu0 0.0
        %999 = vmatmul.mubr.f32.gmra.mxu0 %v883
        %v1000 = vpop.f32.mrf.mxu0
        %v1001 = vadd.f32 %v926, %v1000
        %v1002 = vpop.f32.mrf.mxu0
        %v1003 = vadd.f32 %v926, %v1002
        %1004 = vdwg.mxu0
        %v1005 = vmax.f32 %v995, 0.0
        %v1006 = vmax.f32 %v997, 0.0
        %v1007 = vmax.f32 %v1001, 0.0
        %v1008 = vmax.f32 %v1003, 0.0
        %1009 = vst [vmem:[%s259] sm:$0xff] %v1005
        %1010 = vst [vmem:[%s259 + $0x8] sm:$0xff] %v1006
        %1011 = vst [vmem:[%s259 + $0x10] sm:$0xff] %v1007
        %1012 = vst [vmem:[%s259 + $0x18] sm:$0xff] %v1008
        %s1013 = sand.u32 %s160, 1
        %s1014 = scalar_lea.sflag [#allocation8], %s1013
        %s1015 = sand.u32 %s160, 1
        %s1016 = smul.addr %s1015, 32
        %s1017 = scalar_lea.vmem [#allocation9], %s1016
        // Predicated region
        $region49: #{tpu_custom_call.1} parent=43 // pred_check
          %p1018 = pneg %p170
        $region50: #{tpu_custom_call.1} parent=43 // pred_check_branch
          %1020 = sbr.rel (%p1018) target = $region52
        $region51: #{tpu_custom_call.1} parent=43 // pred_region
          %s1022 = ssub.s32 512, 512
          %1023 = vsyncadd %s1014, %s1022
          %s1024 = smul.addr %s21, 4
          %s1025 = smul.addr %s1024, 128
          %s1026 = scalar_lea.hbm %s6, %s1025
          %s1027 = sshll.u32 %s1017, 4
          %s1028 = int_to_ptr.vmem [resolvable:$true] %s1027
          %1033 = dma.vmem_to_hbm [thread:$0]  %s1028, 512, %s1026, %s1014, 256, 256, 16
        $region52: #{tpu_custom_call.1} parent=43 // pred_fallthru
          _
      $region44: #{tpu_custom_call.1} parent=5 // pred_fallthru
        _
      %p1034 = scmp.le.s32.totalorder 2, %s16
      // Predicated region
      $region53: #{tpu_custom_call.1} parent=5 // pred_check
        %p1035 = pneg %p1034
      $region54: #{tpu_custom_call.1} parent=5 // pred_check_branch
        %1037 = sbr.rel (%p1035) target = $region56
      $region55: #{tpu_custom_call.1} parent=5 // pred_region
        %s1038 = ssub.s32 %s16, 2
        // Predicated region
        $region57: #{tpu_custom_call.1} parent=55 // pred_check
          %p1039 = pneg %p176
        $region58: #{tpu_custom_call.1} parent=55 // pred_check_branch
          %1041 = sbr.rel (%p1039) target = $region60
        $region59: #{tpu_custom_call.1} parent=55 // pred_region
          %s1042 = sand.u32 %s161, 1
          %s1043 = scalar_lea.sflag [#allocation8], %s1042
          %s1044 = sand.u32 %s161, 1
          %s1045 = smul.addr %s1044, 32
          %s1046 = scalar_lea.vmem [#allocation9], %s1045
          %1047 = dma.done %s1043, 512
        $region60: #{tpu_custom_call.1} parent=55 // pred_fallthru
          _
      $region56: #{tpu_custom_call.1} parent=5 // pred_fallthru
        _
    $region6: #{tpu_custom_call.1} parent=1 // loop_footer
      %s20 = sadd.s32 1, %s16
    $region7: #{tpu_custom_call.1} parent=1 // loop_footer_branch
      %15 = sbr.rel target = $region3
    $region8: #{tpu_custom_call.1} parent=1 // loop_exit
      _
    %1048 = vsyncpa [#allocation7], 1
    %s1049 = scalar_lea.sflag [#allocation7], 1
    %1050 = vsyncpa %s1049, 1
    %1051 = vsyncpa [#allocation8], 1
    %s1052 = scalar_lea.sflag [#allocation8], 1
    %1053 = vsyncpa %s1052, 1

</llo_original>
